<compile_context>
chip_gen: v7x
topology: tpu7x:2x2x1
jax: 0.10.0
libtpu: 0.0.40
codegen_flags: <defaults>
</compile_context>

<pallas_src>
import math

import jax
import jax.numpy as jnp
from jax.experimental import pallas as pl
from jax.experimental.pallas import tpu as pltpu

# ---- model dims (small, consistent with the module's shape conventions) ----
B = 2            # batch
S = 16           # sequence length (max_input_length)
D = 32           # d_model (embed_dim)
H = 4            # encoder_attention_heads
HD = D // H      # head_dim
FFN = 64         # encoder_ffn_dim
FFN_PAD = 128    # FFN hidden dim zero-padded to a full lane width
N = B * S
LN_EPS = 1e-5
NEG_INF = -1e30


def _layernorm(h, w, b):
    mu = jnp.mean(h, axis=-1, keepdims=True)
    var = jnp.mean((h - mu) ** 2, axis=-1, keepdims=True)
    return (h - mu) * jax.lax.rsqrt(var + LN_EPS) * w + b


def _gelu(x):
    # tensorrt_llm functional.gelu == tanh approximation
    return 0.5 * x * (1.0 + jnp.tanh(0.7978845608028654 * (x + 0.044715 * x * x * x)))


def whisper_encoder_layer_kernel(
    lens_ref,      # scalar prefetch: (B,) int32 in SMEM
    x_ref,         # (S, D)  this batch element's rows
    wqkv_ref,      # (D, 3*D) fused QKV weight, original lane-dense layout
    wo_ref,        # (D, D)   output projection weight
    mpack_ref,     # (D+FFN_PAD, FFN_PAD): rows[0:D]=fc1_w (lane-padded),
                   #                       rows[D:D+FFN_PAD, 0:D]=fc2_w (row-padded)
    vpack_ref,     # (8, 128) packed small vectors
    o_ref,         # (S, D)
):
    b = pl.program_id(0)
    x = x_ref[...]                              # (S, D) f32, residual #1

    ln1w = vpack_ref[0:1, :D]
    ln1b = vpack_ref[1:2, :D]
    ln2w = vpack_ref[2:3, :D]
    ln2b = vpack_ref[3:4, :D]
    outb = vpack_ref[4:5, :D]
    fc2b = vpack_ref[5:6, :D]
    fc1b = vpack_ref[6:7, :]                    # (1, FFN_PAD), zero-padded
    bqkv = vpack_ref[7:8, :3 * D]               # (1, 3*D) fused QKV bias

    # ---- self_attn_layer_norm (pre-LN) ----
    h = _layernorm(x, ln1w, ln1b)               # (S, D)

    # ---- fused QKV: one lane-dense matmul -> (S, 96) ----
    qkv = jnp.dot(h, wqkv_ref[...], preferred_element_type=jnp.float32) + bqkv
    q = qkv[:, 0:D]
    k = qkv[:, D:2 * D]
    v = qkv[:, 2 * D:3 * D]

    # ---- ragged key mask for this batch element, built once: (1, S) ----
    # TODO(synk): rows with input_lengths[b] == 0 make softmax uniform over
    # fully-masked keys (same as the reference); guard upstream if needed.
    k_pos = jax.lax.broadcasted_iota(jnp.int32, (1, S), 1)
    valid = k_pos < lens_ref[b]

    # ---- attention: per-head softmax(QK^T / sqrt(hd)) V (H=4 static loop) --
    scale = 1.0 / math.sqrt(HD)
    ctx_heads = []
    for hh in range(H):
        sl = slice(hh * HD, (hh + 1) * HD)
        qh = q[:, sl]                           # (S, HD)
        kh = k[:, sl]
        vh = v[:, sl]
        # contract last dims of both operands: q @ k^T without an explicit
        # XLU transpose of K.
        s = jax.lax.dot_general(qh, kh, (((1,), (1,)), ((), ())),
                                preferred_element_type=jnp.float32) * scale
        s = jnp.where(valid, s, NEG_INF)        # (S, S)
        s = s - jnp.max(s, axis=-1, keepdims=True)
        p = jnp.exp(s)
        p = p * pl.reciprocal(jnp.sum(p, axis=-1, keepdims=True), approx=False)
        ctx_heads.append(jnp.dot(p, vh, preferred_element_type=jnp.float32))
    ctx = jnp.concatenate(ctx_heads, axis=-1)   # (S, D) lane-concat of heads

    # ---- head-concat + output projection == one (S,D)@(D,D) matmul ----
    attn = jnp.dot(ctx, wo_ref[...], preferred_element_type=jnp.float32) + outb
    h1 = x + attn                               # residual add #1

    # ---- final_layer_norm + GELU FFN (FFN zero-padded to 128 lanes) ----
    h2 = _layernorm(h1, ln2w, ln2b)
    f1w = mpack_ref[0:D, :]                     # (D, FFN_PAD) full-lane load
    f2w = mpack_ref[D:D + FFN_PAD, 0:D]         # (FFN_PAD, D)
    h2 = jnp.dot(h2, f1w, preferred_element_type=jnp.float32) + fc1b
    h2 = _gelu(h2)                              # padded lanes stay exactly 0
    h2 = jnp.dot(h2, f2w, preferred_element_type=jnp.float32) + fc2b

    o_ref[...] = (h1 + h2).astype(o_ref.dtype)  # residual add #2


def whisper_encoder_layer(hidden_states, input_lengths, params):
    """hidden_states: [B, S, D] f32; input_lengths: [B] int32."""
    x2d = hidden_states.reshape(N, D)

    wqkv = params["qkv_w"]                       # (D, 3*D), original layout
    wo = params["out_w"]                         # (D, D)

    # FFN weights zero-padded to a 128-wide hidden dim and packed into one block.
    mpack = jnp.zeros((D + FFN_PAD, FFN_PAD), jnp.float32)
    mpack = mpack.at[0:D, 0:FFN].set(params["fc1_w"])
    mpack = mpack.at[D:D + FFN, 0:D].set(params["fc2_w"])

    # Pack the 8 small per-feature vectors into one (8, 128) block.
    vpack = jnp.zeros((8, 128), jnp.float32)
    vpack = vpack.at[0, :D].set(params["ln1_w"].reshape(D))
    vpack = vpack.at[1, :D].set(params["ln1_b"].reshape(D))
    vpack = vpack.at[2, :D].set(params["ln2_w"].reshape(D))
    vpack = vpack.at[3, :D].set(params["ln2_b"].reshape(D))
    vpack = vpack.at[4, :D].set(params["out_b"].reshape(D))
    vpack = vpack.at[5, :D].set(params["fc2_b"].reshape(D))
    vpack = vpack.at[6, :FFN].set(params["fc1_b"].reshape(FFN))
    vpack = vpack.at[7, :3 * D].set(params["qkv_b"].reshape(3 * D))

    grid_spec = pltpu.PrefetchScalarGridSpec(
        num_scalar_prefetch=1,
        grid=(B,),                               # one batch element per step
        in_specs=[
            pl.BlockSpec((S, D), lambda b, lens: (b, 0)),            # x rows
            pl.BlockSpec((D, 3 * D), lambda b, lens: (0, 0)),        # wqkv
            pl.BlockSpec((D, D), lambda b, lens: (0, 0)),            # wo
            pl.BlockSpec((D + FFN_PAD, FFN_PAD), lambda b, lens: (0, 0)),
            pl.BlockSpec((8, 128), lambda b, lens: (0, 0)),          # vpack
        ],
        out_specs=pl.BlockSpec((S, D), lambda b, lens: (b, 0)),
    )

    fn = pl.pallas_call(
        whisper_encoder_layer_kernel,
        out_shape=jax.ShapeDtypeStruct((N, D), jnp.float32),
        grid_spec=grid_spec,
        compiler_params=pltpu.CompilerParams(
            dimension_semantics=("parallel",)),   # v7x: one batch elem per TC
    )
    out2d = fn(input_lengths, x2d, wqkv, wo, mpack, vpack)
    return out2d.reshape(B, S, D)


def make_params(key):
    ks = jax.random.split(key, 8)
    scale = 0.02
    return {
        "ln1_w": jnp.ones((1, D), jnp.float32),
        "ln1_b": jnp.zeros((1, D), jnp.float32),
        "ln2_w": jnp.ones((1, D), jnp.float32),
        "ln2_b": jnp.zeros((1, D), jnp.float32),
        "qkv_w": scale * jax.random.normal(ks[0], (D, 3 * D), jnp.float32),
        "qkv_b": scale * jax.random.normal(ks[1], (1, 3 * D), jnp.float32),
        "out_w": scale * jax.random.normal(ks[2], (D, D), jnp.float32),
        "out_b": scale * jax.random.normal(ks[3], (1, D), jnp.float32),
        "fc1_w": scale * jax.random.normal(ks[4], (D, FFN), jnp.float32),
        "fc1_b": scale * jax.random.normal(ks[5], (1, FFN), jnp.float32),
        "fc2_w": scale * jax.random.normal(ks[6], (FFN, D), jnp.float32),
        "fc2_b": scale * jax.random.normal(ks[7], (1, D), jnp.float32),
    }


def reference(hidden_states, input_lengths, p):
    """Pure-JAX reference of the same forward pass."""
    x = hidden_states
    h = _layernorm(x, p["ln1_w"][0], p["ln1_b"][0])
    qkv = h @ p["qkv_w"] + p["qkv_b"][0]
    q, k, v = qkv[..., :D], qkv[..., D:2 * D], qkv[..., 2 * D:]
    q = q.reshape(B, S, H, HD).transpose(0, 2, 1, 3)
    k = k.reshape(B, S, H, HD).transpose(0, 2, 1, 3)
    v = v.reshape(B, S, H, HD).transpose(0, 2, 1, 3)
    s = jnp.einsum("bhqd,bhkd->bhqk", q, k) / math.sqrt(HD)
    key_valid = (jnp.arange(S)[None, None, None, :] <
                 input_lengths[:, None, None, None])
    s = jnp.where(key_valid, s, NEG_INF)
    pattn = jax.nn.softmax(s, axis=-1)
    a = jnp.einsum("bhqk,bhkd->bhqd", pattn, v).transpose(0, 2, 1, 3).reshape(B, S, D)
    a = a @ p["out_w"] + p["out_b"][0]
    h1 = x + a
    h2 = _layernorm(h1, p["ln2_w"][0], p["ln2_b"][0])
    h2 = _gelu(h2 @ p["fc1_w"] + p["fc1_b"][0])
    h2 = h2 @ p["fc2_w"] + p["fc2_b"][0]
    return h1 + h2


if __name__ == "__main__":
    key = jax.random.PRNGKey(0)
    k_x, k_p = jax.random.split(key)
    x = jax.random.normal(k_x, (B, S, D), jnp.float32)
    input_lengths = jnp.array([S, S - 4], jnp.int32)   # ragged rows
    params = make_params(k_p)

    out = whisper_encoder_layer(x, input_lengths, params)
    out = jax.block_until_ready(out)

    ref = reference(x, input_lengths, params)
    assert out.shape == (B, S, D)
    assert jnp.allclose(out, ref, atol=1e-3, rtol=1e-3), "mismatch vs reference"
    print("KERNEL_OK")
</pallas_src>

<mosaic_0001>
module attributes {stable_mosaic.version = 11 : i64} {
  func.func @whisper_encoder_layer_kernel(%arg0: i32, %arg1: memref<2xi32, #tpu.memory_space<smem>>, %arg2: memref<16x32xf32, #tpu.memory_space<vmem>>, %arg3: memref<32x96xf32, #tpu.memory_space<vmem>>, %arg4: memref<32x32xf32, #tpu.memory_space<vmem>>, %arg5: memref<160x128xf32, #tpu.memory_space<vmem>>, %arg6: memref<8x128xf32, #tpu.memory_space<vmem>>, %arg7: memref<16x32xf32, #tpu.memory_space<vmem>>) attributes {dimension_semantics = [#tpu.dimension_semantics<parallel>], iteration_bounds = array<i64: 2>, scalar_prefetch = 1 : i64, scratch_operands = 0 : i64, tpu.core_type = #tpu.core_type<tc>, window_params = [{transform_indices = @transform_0, window_bounds = array<i64: 16, 32>}, {pipeline_mode = #tpu.pipeline_mode<synchronous>, transform_indices = @transform_1, window_bounds = array<i64: 32, 96>}, {pipeline_mode = #tpu.pipeline_mode<synchronous>, transform_indices = @transform_2, window_bounds = array<i64: 32, 32>}, {pipeline_mode = #tpu.pipeline_mode<synchronous>, transform_indices = @transform_3, window_bounds = array<i64: 160, 128>}, {pipeline_mode = #tpu.pipeline_mode<synchronous>, transform_indices = @transform_4, window_bounds = array<i64: 8, 128>}, {transform_indices = @transform_5, window_bounds = array<i64: 16, 32>}]} {
    %c0 = arith.constant 0 : index
    %c0_0 = arith.constant 0 : index
    %0 = vector.load %arg2[%c0, %c0_0] : memref<16x32xf32, #tpu.memory_space<vmem>>, vector<16x32xf32>
    %c0_1 = arith.constant 0 : index
    %c0_2 = arith.constant 0 : index
    %1 = vector.load %arg6[%c0_1, %c0_2] : memref<8x128xf32, #tpu.memory_space<vmem>>, vector<1x32xf32>
    %c1 = arith.constant 1 : index
    %c0_3 = arith.constant 0 : index
    %2 = vector.load %arg6[%c1, %c0_3] : memref<8x128xf32, #tpu.memory_space<vmem>>, vector<1x32xf32>
    %c2 = arith.constant 2 : index
    %c0_4 = arith.constant 0 : index
    %3 = vector.load %arg6[%c2, %c0_4] : memref<8x128xf32, #tpu.memory_space<vmem>>, vector<1x32xf32>
    %c3 = arith.constant 3 : index
    %c0_5 = arith.constant 0 : index
    %4 = vector.load %arg6[%c3, %c0_5] : memref<8x128xf32, #tpu.memory_space<vmem>>, vector<1x32xf32>
    %c4 = arith.constant 4 : index
    %c0_6 = arith.constant 0 : index
    %5 = vector.load %arg6[%c4, %c0_6] : memref<8x128xf32, #tpu.memory_space<vmem>>, vector<1x32xf32>
    %c5 = arith.constant 5 : index
    %c0_7 = arith.constant 0 : index
    %6 = vector.load %arg6[%c5, %c0_7] : memref<8x128xf32, #tpu.memory_space<vmem>>, vector<1x32xf32>
    %c6 = arith.constant 6 : index
    %c0_8 = arith.constant 0 : index
    %7 = vector.load %arg6[%c6, %c0_8] : memref<8x128xf32, #tpu.memory_space<vmem>>, vector<1x128xf32>
    %c7 = arith.constant 7 : index
    %c0_9 = arith.constant 0 : index
    %8 = vector.load %arg6[%c7, %c0_9] : memref<8x128xf32, #tpu.memory_space<vmem>>, vector<1x96xf32>
    %cst = arith.constant dense<0.000000e+00> : vector<16xf32>
    %9 = vector.multi_reduction <add>, %0, %cst [1] : vector<16x32xf32> to vector<16xf32>
    %10 = vector.shape_cast %9 : vector<16xf32> to vector<16x1xf32>
    %cst_10 = arith.constant 3.200000e+01 : f32
    %11 = vector.broadcast %cst_10 : f32 to vector<16x1xf32>
    %12 = arith.divf %10, %11 : vector<16x1xf32>
    %13 = vector.broadcast %12 : vector<16x1xf32> to vector<16x32xf32>
    %14 = arith.subf %0, %13 : vector<16x32xf32>
    %15 = arith.mulf %14, %14 : vector<16x32xf32>
    %cst_11 = arith.constant dense<0.000000e+00> : vector<16xf32>
    %16 = vector.multi_reduction <add>, %15, %cst_11 [1] : vector<16x32xf32> to vector<16xf32>
    %17 = vector.shape_cast %16 : vector<16xf32> to vector<16x1xf32>
    %cst_12 = arith.constant 3.200000e+01 : f32
    %18 = vector.broadcast %cst_12 : f32 to vector<16x1xf32>
    %19 = arith.divf %17, %18 : vector<16x1xf32>
    %20 = vector.broadcast %12 : vector<16x1xf32> to vector<16x32xf32>
    %21 = arith.subf %0, %20 : vector<16x32xf32>
    %cst_13 = arith.constant 9.99999974E-6 : f32
    %22 = vector.broadcast %cst_13 : f32 to vector<16x1xf32>
    %23 = arith.addf %19, %22 : vector<16x1xf32>
    %24 = math.rsqrt %23 : vector<16x1xf32>
    %25 = vector.broadcast %24 : vector<16x1xf32> to vector<16x32xf32>
    %26 = arith.mulf %21, %25 : vector<16x32xf32>
    %27 = vector.broadcast %1 : vector<1x32xf32> to vector<16x32xf32>
    %28 = arith.mulf %26, %27 : vector<16x32xf32>
    %29 = vector.broadcast %2 : vector<1x32xf32> to vector<16x32xf32>
    %30 = arith.addf %28, %29 : vector<16x32xf32>
    %c0_14 = arith.constant 0 : index
    %c0_15 = arith.constant 0 : index
    %31 = vector.load %arg3[%c0_14, %c0_15] : memref<32x96xf32, #tpu.memory_space<vmem>>, vector<32x96xf32>
    %cst_16 = arith.constant dense<0.000000e+00> : vector<16x96xf32>
    %32 = tpu.matmul %30, %31, %cst_16 {dimension_numbers = #tpu.dot_dimension_numbers<[1], [0], [0], [1], [0, 0, 1, 1], [], []>} : vector<16x32xf32>, vector<32x96xf32>, vector<16x96xf32> -> vector<16x96xf32>
    %33 = vector.broadcast %8 : vector<1x96xf32> to vector<16x96xf32>
    %34 = arith.addf %32, %33 : vector<16x96xf32>
    %35 = vector.extract_strided_slice %34 {offsets = [0, 0], sizes = [16, 32], strides = [1, 1]} : vector<16x96xf32> to vector<16x32xf32>
    %36 = vector.extract_strided_slice %34 {offsets = [0, 32], sizes = [16, 32], strides = [1, 1]} : vector<16x96xf32> to vector<16x32xf32>
    %37 = vector.extract_strided_slice %34 {offsets = [0, 64], sizes = [16, 32], strides = [1, 1]} : vector<16x96xf32> to vector<16x32xf32>
    %38 = tpu.iota {dimensions = array<i32: 1>} : vector<1x16xi32>
    %39 = arith.index_cast %arg0 : i32 to index
    %40 = memref.load %arg1[%39] : memref<2xi32, #tpu.memory_space<smem>>
    %41 = vector.broadcast %40 : i32 to vector<1x16xi32>
    %42 = arith.cmpi slt, %38, %41 : vector<1x16xi32>
    %43 = vector.extract_strided_slice %35 {offsets = [0, 0], sizes = [16, 8], strides = [1, 1]} : vector<16x32xf32> to vector<16x8xf32>
    %44 = vector.extract_strided_slice %36 {offsets = [0, 0], sizes = [16, 8], strides = [1, 1]} : vector<16x32xf32> to vector<16x8xf32>
    %45 = vector.extract_strided_slice %37 {offsets = [0, 0], sizes = [16, 8], strides = [1, 1]} : vector<16x32xf32> to vector<16x8xf32>
    %cst_17 = arith.constant dense<0.000000e+00> : vector<16x16xf32>
    %46 = tpu.matmul %43, %44, %cst_17 {dimension_numbers = #tpu.dot_dimension_numbers<[1], [1], [0], [0], [0, 0, 1, 0], [], []>} : vector<16x8xf32>, vector<16x8xf32>, vector<16x16xf32> -> vector<16x16xf32>
    %cst_18 = arith.constant 0.353553385 : f32
    %47 = vector.broadcast %cst_18 : f32 to vector<16x16xf32>
    %48 = arith.mulf %46, %47 : vector<16x16xf32>
    %cst_19 = arith.constant -1.000000e+30 : f32
    %49 = vector.shape_cast %42 : vector<1x16xi1> to vector<1x16xi1>
    %50 = vector.broadcast %49 : vector<1x16xi1> to vector<16x16xi1>
    %51 = vector.broadcast %cst_19 : f32 to vector<16x16xf32>
    %52 = arith.select %50, %48, %51 : vector<16x16xi1>, vector<16x16xf32>
    %cst_20 = arith.constant dense<0xFF800000> : vector<16xf32>
    %53 = vector.multi_reduction <maximumf>, %52, %cst_20 [1] : vector<16x16xf32> to vector<16xf32>
    %54 = vector.shape_cast %53 : vector<16xf32> to vector<16x1xf32>
    %55 = vector.broadcast %54 : vector<16x1xf32> to vector<16x16xf32>
    %56 = arith.subf %52, %55 : vector<16x16xf32>
    %57 = math.exp %56 : vector<16x16xf32>
    %cst_21 = arith.constant dense<0.000000e+00> : vector<16xf32>
    %58 = vector.multi_reduction <add>, %57, %cst_21 [1] : vector<16x16xf32> to vector<16xf32>
    %59 = vector.shape_cast %58 : vector<16xf32> to vector<16x1xf32>
    %60 = tpu.reciprocal %59 : vector<16x1xf32> -> vector<16x1xf32>
    %61 = vector.broadcast %60 : vector<16x1xf32> to vector<16x16xf32>
    %62 = arith.mulf %57, %61 : vector<16x16xf32>
    %cst_22 = arith.constant dense<0.000000e+00> : vector<16x8xf32>
    %63 = tpu.matmul %62, %45, %cst_22 {dimension_numbers = #tpu.dot_dimension_numbers<[1], [0], [0], [1], [0, 0, 1, 1], [], []>} : vector<16x16xf32>, vector<16x8xf32>, vector<16x8xf32> -> vector<16x8xf32>
    %64 = vector.extract_strided_slice %35 {offsets = [0, 8], sizes = [16, 8], strides = [1, 1]} : vector<16x32xf32> to vector<16x8xf32>
    %65 = vector.extract_strided_slice %36 {offsets = [0, 8], sizes = [16, 8], strides = [1, 1]} : vector<16x32xf32> to vector<16x8xf32>
    %66 = vector.extract_strided_slice %37 {offsets = [0, 8], sizes = [16, 8], strides = [1, 1]} : vector<16x32xf32> to vector<16x8xf32>
    %cst_23 = arith.constant dense<0.000000e+00> : vector<16x16xf32>
    %67 = tpu.matmul %64, %65, %cst_23 {dimension_numbers = #tpu.dot_dimension_numbers<[1], [1], [0], [0], [0, 0, 1, 0], [], []>} : vector<16x8xf32>, vector<16x8xf32>, vector<16x16xf32> -> vector<16x16xf32>
    %cst_24 = arith.constant 0.353553385 : f32
    %68 = vector.broadcast %cst_24 : f32 to vector<16x16xf32>
    %69 = arith.mulf %67, %68 : vector<16x16xf32>
    %cst_25 = arith.constant -1.000000e+30 : f32
    %70 = vector.shape_cast %42 : vector<1x16xi1> to vector<1x16xi1>
    %71 = vector.broadcast %70 : vector<1x16xi1> to vector<16x16xi1>
    %72 = vector.broadcast %cst_25 : f32 to vector<16x16xf32>
    %73 = arith.select %71, %69, %72 : vector<16x16xi1>, vector<16x16xf32>
    %cst_26 = arith.constant dense<0xFF800000> : vector<16xf32>
    %74 = vector.multi_reduction <maximumf>, %73, %cst_26 [1] : vector<16x16xf32> to vector<16xf32>
    %75 = vector.shape_cast %74 : vector<16xf32> to vector<16x1xf32>
    %76 = vector.broadcast %75 : vector<16x1xf32> to vector<16x16xf32>
    %77 = arith.subf %73, %76 : vector<16x16xf32>
    %78 = math.exp %77 : vector<16x16xf32>
    %cst_27 = arith.constant dense<0.000000e+00> : vector<16xf32>
    %79 = vector.multi_reduction <add>, %78, %cst_27 [1] : vector<16x16xf32> to vector<16xf32>
    %80 = vector.shape_cast %79 : vector<16xf32> to vector<16x1xf32>
    %81 = tpu.reciprocal %80 : vector<16x1xf32> -> vector<16x1xf32>
    %82 = vector.broadcast %81 : vector<16x1xf32> to vector<16x16xf32>
    %83 = arith.mulf %78, %82 : vector<16x16xf32>
    %cst_28 = arith.constant dense<0.000000e+00> : vector<16x8xf32>
    %84 = tpu.matmul %83, %66, %cst_28 {dimension_numbers = #tpu.dot_dimension_numbers<[1], [0], [0], [1], [0, 0, 1, 1], [], []>} : vector<16x16xf32>, vector<16x8xf32>, vector<16x8xf32> -> vector<16x8xf32>
    %85 = vector.extract_strided_slice %35 {offsets = [0, 16], sizes = [16, 8], strides = [1, 1]} : vector<16x32xf32> to vector<16x8xf32>
    %86 = vector.extract_strided_slice %36 {offsets = [0, 16], sizes = [16, 8], strides = [1, 1]} : vector<16x32xf32> to vector<16x8xf32>
    %87 = vector.extract_strided_slice %37 {offsets = [0, 16], sizes = [16, 8], strides = [1, 1]} : vector<16x32xf32> to vector<16x8xf32>
    %cst_29 = arith.constant dense<0.000000e+00> : vector<16x16xf32>
    %88 = tpu.matmul %85, %86, %cst_29 {dimension_numbers = #tpu.dot_dimension_numbers<[1], [1], [0], [0], [0, 0, 1, 0], [], []>} : vector<16x8xf32>, vector<16x8xf32>, vector<16x16xf32> -> vector<16x16xf32>
    %cst_30 = arith.constant 0.353553385 : f32
    %89 = vector.broadcast %cst_30 : f32 to vector<16x16xf32>
    %90 = arith.mulf %88, %89 : vector<16x16xf32>
    %cst_31 = arith.constant -1.000000e+30 : f32
    %91 = vector.shape_cast %42 : vector<1x16xi1> to vector<1x16xi1>
    %92 = vector.broadcast %91 : vector<1x16xi1> to vector<16x16xi1>
    %93 = vector.broadcast %cst_31 : f32 to vector<16x16xf32>
    %94 = arith.select %92, %90, %93 : vector<16x16xi1>, vector<16x16xf32>
    %cst_32 = arith.constant dense<0xFF800000> : vector<16xf32>
    %95 = vector.multi_reduction <maximumf>, %94, %cst_32 [1] : vector<16x16xf32> to vector<16xf32>
    %96 = vector.shape_cast %95 : vector<16xf32> to vector<16x1xf32>
    %97 = vector.broadcast %96 : vector<16x1xf32> to vector<16x16xf32>
    %98 = arith.subf %94, %97 : vector<16x16xf32>
    %99 = math.exp %98 : vector<16x16xf32>
    %cst_33 = arith.constant dense<0.000000e+00> : vector<16xf32>
    %100 = vector.multi_reduction <add>, %99, %cst_33 [1] : vector<16x16xf32> to vector<16xf32>
    %101 = vector.shape_cast %100 : vector<16xf32> to vector<16x1xf32>
    %102 = tpu.reciprocal %101 : vector<16x1xf32> -> vector<16x1xf32>
    %103 = vector.broadcast %102 : vector<16x1xf32> to vector<16x16xf32>
    %104 = arith.mulf %99, %103 : vector<16x16xf32>
    %cst_34 = arith.constant dense<0.000000e+00> : vector<16x8xf32>
    %105 = tpu.matmul %104, %87, %cst_34 {dimension_numbers = #tpu.dot_dimension_numbers<[1], [0], [0], [1], [0, 0, 1, 1], [], []>} : vector<16x16xf32>, vector<16x8xf32>, vector<16x8xf32> -> vector<16x8xf32>
    %106 = vector.extract_strided_slice %35 {offsets = [0, 24], sizes = [16, 8], strides = [1, 1]} : vector<16x32xf32> to vector<16x8xf32>
    %107 = vector.extract_strided_slice %36 {offsets = [0, 24], sizes = [16, 8], strides = [1, 1]} : vector<16x32xf32> to vector<16x8xf32>
    %108 = vector.extract_strided_slice %37 {offsets = [0, 24], sizes = [16, 8], strides = [1, 1]} : vector<16x32xf32> to vector<16x8xf32>
    %cst_35 = arith.constant dense<0.000000e+00> : vector<16x16xf32>
    %109 = tpu.matmul %106, %107, %cst_35 {dimension_numbers = #tpu.dot_dimension_numbers<[1], [1], [0], [0], [0, 0, 1, 0], [], []>} : vector<16x8xf32>, vector<16x8xf32>, vector<16x16xf32> -> vector<16x16xf32>
    %cst_36 = arith.constant 0.353553385 : f32
    %110 = vector.broadcast %cst_36 : f32 to vector<16x16xf32>
    %111 = arith.mulf %109, %110 : vector<16x16xf32>
    %cst_37 = arith.constant -1.000000e+30 : f32
    %112 = vector.shape_cast %42 : vector<1x16xi1> to vector<1x16xi1>
    %113 = vector.broadcast %112 : vector<1x16xi1> to vector<16x16xi1>
    %114 = vector.broadcast %cst_37 : f32 to vector<16x16xf32>
    %115 = arith.select %113, %111, %114 : vector<16x16xi1>, vector<16x16xf32>
    %cst_38 = arith.constant dense<0xFF800000> : vector<16xf32>
    %116 = vector.multi_reduction <maximumf>, %115, %cst_38 [1] : vector<16x16xf32> to vector<16xf32>
    %117 = vector.shape_cast %116 : vector<16xf32> to vector<16x1xf32>
    %118 = vector.broadcast %117 : vector<16x1xf32> to vector<16x16xf32>
    %119 = arith.subf %115, %118 : vector<16x16xf32>
    %120 = math.exp %119 : vector<16x16xf32>
    %cst_39 = arith.constant dense<0.000000e+00> : vector<16xf32>
    %121 = vector.multi_reduction <add>, %120, %cst_39 [1] : vector<16x16xf32> to vector<16xf32>
    %122 = vector.shape_cast %121 : vector<16xf32> to vector<16x1xf32>
    %123 = tpu.reciprocal %122 : vector<16x1xf32> -> vector<16x1xf32>
    %124 = vector.broadcast %123 : vector<16x1xf32> to vector<16x16xf32>
    %125 = arith.mulf %120, %124 : vector<16x16xf32>
    %cst_40 = arith.constant dense<0.000000e+00> : vector<16x8xf32>
    %126 = tpu.matmul %125, %108, %cst_40 {dimension_numbers = #tpu.dot_dimension_numbers<[1], [0], [0], [1], [0, 0, 1, 1], [], []>} : vector<16x16xf32>, vector<16x8xf32>, vector<16x8xf32> -> vector<16x8xf32>
    %127 = tpu.concatenate %63, %84, %105, %126 in 1 : vector<16x8xf32>, vector<16x8xf32>, vector<16x8xf32>, vector<16x8xf32> -> vector<16x32xf32>
    %c0_41 = arith.constant 0 : index
    %c0_42 = arith.constant 0 : index
    %128 = vector.load %arg4[%c0_41, %c0_42] : memref<32x32xf32, #tpu.memory_space<vmem>>, vector<32x32xf32>
    %cst_43 = arith.constant dense<0.000000e+00> : vector<16x32xf32>
    %129 = tpu.matmul %127, %128, %cst_43 {dimension_numbers = #tpu.dot_dimension_numbers<[1], [0], [0], [1], [0, 0, 1, 1], [], []>} : vector<16x32xf32>, vector<32x32xf32>, vector<16x32xf32> -> vector<16x32xf32>
    %130 = vector.broadcast %5 : vector<1x32xf32> to vector<16x32xf32>
    %131 = arith.addf %129, %130 : vector<16x32xf32>
    %132 = arith.addf %0, %131 : vector<16x32xf32>
    %cst_44 = arith.constant dense<0.000000e+00> : vector<16xf32>
    %133 = vector.multi_reduction <add>, %132, %cst_44 [1] : vector<16x32xf32> to vector<16xf32>
    %134 = vector.shape_cast %133 : vector<16xf32> to vector<16x1xf32>
    %cst_45 = arith.constant 3.200000e+01 : f32
    %135 = vector.broadcast %cst_45 : f32 to vector<16x1xf32>
    %136 = arith.divf %134, %135 : vector<16x1xf32>
    %137 = vector.broadcast %136 : vector<16x1xf32> to vector<16x32xf32>
    %138 = arith.subf %132, %137 : vector<16x32xf32>
    %139 = arith.mulf %138, %138 : vector<16x32xf32>
    %cst_46 = arith.constant dense<0.000000e+00> : vector<16xf32>
    %140 = vector.multi_reduction <add>, %139, %cst_46 [1] : vector<16x32xf32> to vector<16xf32>
    %141 = vector.shape_cast %140 : vector<16xf32> to vector<16x1xf32>
    %cst_47 = arith.constant 3.200000e+01 : f32
    %142 = vector.broadcast %cst_47 : f32 to vector<16x1xf32>
    %143 = arith.divf %141, %142 : vector<16x1xf32>
    %144 = vector.broadcast %136 : vector<16x1xf32> to vector<16x32xf32>
    %145 = arith.subf %132, %144 : vector<16x32xf32>
    %cst_48 = arith.constant 9.99999974E-6 : f32
    %146 = vector.broadcast %cst_48 : f32 to vector<16x1xf32>
    %147 = arith.addf %143, %146 : vector<16x1xf32>
    %148 = math.rsqrt %147 : vector<16x1xf32>
    %149 = vector.broadcast %148 : vector<16x1xf32> to vector<16x32xf32>
    %150 = arith.mulf %145, %149 : vector<16x32xf32>
    %151 = vector.broadcast %3 : vector<1x32xf32> to vector<16x32xf32>
    %152 = arith.mulf %150, %151 : vector<16x32xf32>
    %153 = vector.broadcast %4 : vector<1x32xf32> to vector<16x32xf32>
    %154 = arith.addf %152, %153 : vector<16x32xf32>
    %c0_49 = arith.constant 0 : index
    %c0_50 = arith.constant 0 : index
    %155 = vector.load %arg5[%c0_49, %c0_50] : memref<160x128xf32, #tpu.memory_space<vmem>>, vector<32x128xf32>
    %c32 = arith.constant 32 : index
    %c0_51 = arith.constant 0 : index
    %156 = vector.load %arg5[%c32, %c0_51] : memref<160x128xf32, #tpu.memory_space<vmem>>, vector<128x32xf32>
    %cst_52 = arith.constant dense<0.000000e+00> : vector<16x128xf32>
    %157 = tpu.matmul %154, %155, %cst_52 {dimension_numbers = #tpu.dot_dimension_numbers<[1], [0], [0], [1], [0, 0, 1, 1], [], []>} : vector<16x32xf32>, vector<32x128xf32>, vector<16x128xf32> -> vector<16x128xf32>
    %158 = vector.broadcast %7 : vector<1x128xf32> to vector<16x128xf32>
    %159 = arith.addf %157, %158 : vector<16x128xf32>
    %cst_53 = arith.constant 5.000000e-01 : f32
    %160 = vector.broadcast %cst_53 : f32 to vector<16x128xf32>
    %161 = arith.mulf %160, %159 : vector<16x128xf32>
    %cst_54 = arith.constant 4.471500e-02 : f32
    %162 = vector.broadcast %cst_54 : f32 to vector<16x128xf32>
    %163 = arith.mulf %162, %159 : vector<16x128xf32>
    %164 = arith.mulf %163, %159 : vector<16x128xf32>
    %165 = arith.mulf %164, %159 : vector<16x128xf32>
    %166 = arith.addf %159, %165 : vector<16x128xf32>
    %cst_55 = arith.constant 0.797884583 : f32
    %167 = vector.broadcast %cst_55 : f32 to vector<16x128xf32>
    %168 = arith.mulf %167, %166 : vector<16x128xf32>
    %169 = math.tanh %168 : vector<16x128xf32>
    %cst_56 = arith.constant 1.000000e+00 : f32
    %170 = vector.broadcast %cst_56 : f32 to vector<16x128xf32>
    %171 = arith.addf %170, %169 : vector<16x128xf32>
    %172 = arith.mulf %161, %171 : vector<16x128xf32>
    %cst_57 = arith.constant dense<0.000000e+00> : vector<16x32xf32>
    %173 = tpu.matmul %172, %156, %cst_57 {dimension_numbers = #tpu.dot_dimension_numbers<[1], [0], [0], [1], [0, 0, 1, 1], [], []>} : vector<16x128xf32>, vector<128x32xf32>, vector<16x32xf32> -> vector<16x32xf32>
    %174 = vector.broadcast %6 : vector<1x32xf32> to vector<16x32xf32>
    %175 = arith.addf %173, %174 : vector<16x32xf32>
    %176 = arith.addf %132, %175 : vector<16x32xf32>
    %c0_58 = arith.constant 0 : index
    %c0_59 = arith.constant 0 : index
    %177 = vector.load %arg7[%c0_58, %c0_59] : memref<16x32xf32, #tpu.memory_space<vmem>>, vector<16x32xf32>
    tpu.vector_store %arg7[%c0_58, %c0_59], %176 {strides = array<i32>} : memref<16x32xf32, #tpu.memory_space<vmem>>, vector<16x32xf32>,
    return
  }
  func.func @transform_0(%arg0: i32, %arg1: memref<2xi32, #tpu.memory_space<smem>>) -> (i32, i32) {
    %c0_i32 = arith.constant 0 : i32
    %c0_i32_0 = arith.constant 0 : i32
    return %arg0, %c0_i32 : i32, i32
  }
  func.func @transform_1(%arg0: i32, %arg1: memref<2xi32, #tpu.memory_space<smem>>) -> (i32, i32) {
    %c0_i32 = arith.constant 0 : i32
    %c0_i32_0 = arith.constant 0 : i32
    %c0_i32_1 = arith.constant 0 : i32
    return %c0_i32, %c0_i32_0 : i32, i32
  }
  func.func @transform_2(%arg0: i32, %arg1: memref<2xi32, #tpu.memory_space<smem>>) -> (i32, i32) {
    %c0_i32 = arith.constant 0 : i32
    %c0_i32_0 = arith.constant 0 : i32
    %c0_i32_1 = arith.constant 0 : i32
    return %c0_i32, %c0_i32_0 : i32, i32
  }
  func.func @transform_3(%arg0: i32, %arg1: memref<2xi32, #tpu.memory_space<smem>>) -> (i32, i32) {
    %c0_i32 = arith.constant 0 : i32
    %c0_i32_0 = arith.constant 0 : i32
    %c0_i32_1 = arith.constant 0 : i32
    return %c0_i32, %c0_i32_0 : i32, i32
  }
  func.func @transform_4(%arg0: i32, %arg1: memref<2xi32, #tpu.memory_space<smem>>) -> (i32, i32) {
    %c0_i32 = arith.constant 0 : i32
    %c0_i32_0 = arith.constant 0 : i32
    %c0_i32_1 = arith.constant 0 : i32
    return %c0_i32, %c0_i32_0 : i32, i32
  }
  func.func @transform_5(%arg0: i32, %arg1: memref<2xi32, #tpu.memory_space<smem>>) -> (i32, i32) {
    %c0_i32 = arith.constant 0 : i32
    %c0_i32_0 = arith.constant 0 : i32
    return %arg0, %c0_i32 : i32, i32
  }
}

</mosaic_0001>

<llo_original>
// kernel: tpu_custom_call.1
$region0: #{tpu_custom_call.1}
  #allocation0 [shape = 'u32[]', space=smem, size = 0x4, offset = 0x4, fixed_abs, tag = 'smem constant byte address 0x4 - core index']
  #allocation1 [shape = 'u32[144,128]{1,0:T(1,128)}', space=vmem, size = 0x12000, scoped, tag = 'internal scratch']
  #allocation2 [shape = 's32[1]{0}', space=sflag, size = 0x4, scoped, tag = 'scoped memory for tpu_custom_call.1']
  #allocation3 [shape = 'u8[512]{0}', space=smem, size = 0x200, scoped, tag = 'prefetched SMEM operand 0']
  %s0 = inlined_call_operand.hbm [shape: s32[2], index: 0, kind: input, shape index: {}]
  %s1 = inlined_call_operand.hbm [shape: f32[32,32], index: 1, kind: input, shape index: {}]
  %s2 = inlined_call_operand.hbm [shape: f32[32,96], index: 2, kind: input, shape index: {}]
  %s3 = inlined_call_operand.hbm [shape: f32[32,32], index: 3, kind: input, shape index: {}]
  %s4 = inlined_call_operand.hbm [shape: f32[160,128], index: 4, kind: input, shape index: {}]
  %s5 = inlined_call_operand.vmem [shape: f32[8,128], index: 5, kind: input, shape index: {}]
  %s6 = inlined_call_operand.hbm [shape: f32[32,32], index: 6, kind: output, shape index: {}]
  %s7 = sld [smem:[#allocation0]]
  $region69: #{tpu_custom_call.1} parent=0
    _
  %s9 = ssub.s32 1, %s7
  %s10 = scalar_select 0, %s9, %s7
  %12 = dma.hbm_to_smem %s0, 16, [#allocation3], [#allocation2]
  %13 = dma.done [#allocation2], 16
  %14 = sfence
  $region1: #{tpu_custom_call.1} parent=0
    #allocation4 [shape = 'u8[16384]{0}', space=vmem, size = 0x4000, scoped, tag = 'input window, operand 1']
    #allocation5 [shape = 's32[2]{0}', space=sflag, size = 0x8, scoped, tag = 'scoped memory for tpu_custom_call.1']
    #allocation6 [shape = 's32[2]{0}', space=sflag, size = 0x8, scoped, tag = 'scoped memory for tpu_custom_call.1']
    #allocation7 [shape = 'u8[16384]{0}', space=vmem, size = 0x4000, scoped, tag = 'input window, operand 2, single buffered']
    #allocation8 [shape = 's32[1]{0}', space=sflag, size = 0x4, scoped, tag = 'scoped memory for tpu_custom_call.1']
    #allocation9 [shape = 'u8[16384]{0}', space=vmem, size = 0x4000, scoped, tag = 'input window, operand 3, single buffered']
    #allocation10 [shape = 'u8[81920]{0}', space=vmem, size = 0x14000, scoped, tag = 'input window, operand 4, single buffered']
    #allocation11 [shape = 's32[1]{0}', space=sflag, size = 0x4, scoped, tag = 'scoped memory for tpu_custom_call.1']
    #allocation12 [shape = 'u8[16384]{0}', space=vmem, size = 0x4000, scoped, tag = 'output window, operand 0']
    %15 = vsyncpa [#allocation5], 0
    %s16 = scalar_lea.sflag [#allocation5], 1
    %17 = vsyncpa %s16, 0
    %18 = vsyncpa [#allocation8], 0
    %19 = vsyncpa [#allocation11], 0
    %20 = vsyncpa [#allocation6], 0
    %s21 = scalar_lea.sflag [#allocation6], 1
    %22 = vsyncpa %s21, 0
    loop: start=0, step=1, limit=4
    $region2: #{tpu_custom_call.1} parent=1 // loop_pre_header
      _
    $region3: #{tpu_custom_call.1} parent=1 // loop_header
      %s24 = sphi 0, %s28
      %p25 = scmp.ge.s32.totalorder %s24, 4
      %s34 = sphi 0, %s36
      %s37 = sphi 0, %s34
      %s38 = sphi 0, %s37
      %s54 = sphi 0, %s38
      %s58 = sphi 0, %s58
      %s60 = sphi 0, %s58
      %s61 = sphi 0, %s60
      %s75 = sphi 0, %s61
      %s79 = sphi 0, %s79
      %s81 = sphi 0, %s79
      %s82 = sphi 0, %s81
      %s96 = sphi 0, %s82
      %s100 = sphi 0, %s100
      %s102 = sphi 0, %s100
      %s103 = sphi 0, %s102
      %s117 = sphi 0, %s103
      %s121 = sphi 0, %s121
      %s123 = sphi 0, %s121
      %s124 = sphi 0, %s123
      %s138 = sphi 0, %s124
      %s144 = sphi 0, %s146
      %s147 = sphi 0, %s144
      %s148 = sphi 0, %s147
      %s164 = sphi 0, %s148
    $region4: #{tpu_custom_call.1} parent=1 // loop_header_branch
      %27 = sbr.rel (%p25) target = $region8
    $region5: #{tpu_custom_call.1} parent=1 // loop_body
      %s29 = ssub.s32 %s24, 1
      %s30 = ssub.s32 %s24, 2
      %s31 = sadd.s32 %s24, 1
      %s32 = ssub.s32 %s24, %s31
      %p33 = scmp.eq.s32.totalorder %s32, 0
      %s35 = sadd.s32 %s34, 1
      %s36 = scalar_select %p33, %s34, %s35
      %p39 = pneg %p33
      %p40 = scmp.eq.s32.totalorder %s24, 1
      %p41 = por %p39, %p40
      %p42 = scmp.ne.s32.totalorder %s34, %s37
      %p43 = scmp.eq.s32.totalorder %s24, 0
      %p44 = por %p42, %p43
      %p45 = scmp.ne.s32.totalorder %s34, %s37
      %p46 = scmp.eq.s32.totalorder %s29, 1
      %p47 = por %p45, %p46
      %p48 = scmp.ne.s32.totalorder %s37, %s38
      %p49 = scmp.eq.s32.totalorder %s29, 0
      %p50 = por %p48, %p49
      %p51 = scmp.ne.s32.totalorder %s37, %s38
      %p52 = scmp.eq.s32.totalorder %s30, 1
      %p53 = por %p51, %p52
      %p55 = scmp.ne.s32.totalorder %s38, %s54
      %p56 = scmp.eq.s32.totalorder %s30, 0
      %p57 = por %p55, %p56
      %s59 = sadd.s32 %s58, 1
      %p62 = scmp.eq.s32.totalorder %s24, 1
      %p63 = scmp.ne.s32.totalorder %s58, %s60
      %p64 = scmp.eq.s32.totalorder %s24, 0
      %p65 = por %p63, %p64
      %p66 = scmp.ne.s32.totalorder %s58, %s60
      %p67 = scmp.eq.s32.totalorder %s29, 1
      %p68 = por %p66, %p67
      %p69 = scmp.ne.s32.totalorder %s60, %s61
      %p70 = scmp.eq.s32.totalorder %s29, 0
      %p71 = por %p69, %p70
      %p72 = scmp.ne.s32.totalorder %s60, %s61
      %p73 = scmp.eq.s32.totalorder %s30, 1
      %p74 = por %p72, %p73
      %p76 = scmp.ne.s32.totalorder %s61, %s75
      %p77 = scmp.eq.s32.totalorder %s30, 0
      %p78 = por %p76, %p77
      %s80 = sadd.s32 %s79, 1
      %p83 = scmp.eq.s32.totalorder %s24, 1
      %p84 = scmp.ne.s32.totalorder %s79, %s81
      %p85 = scmp.eq.s32.totalorder %s24, 0
      %p86 = por %p84, %p85
      %p87 = scmp.ne.s32.totalorder %s79, %s81
      %p88 = scmp.eq.s32.totalorder %s29, 1
      %p89 = por %p87, %p88
      %p90 = scmp.ne.s32.totalorder %s81, %s82
      %p91 = scmp.eq.s32.totalorder %s29, 0
      %p92 = por %p90, %p91
      %p93 = scmp.ne.s32.totalorder %s81, %s82
      %p94 = scmp.eq.s32.totalorder %s30, 1
      %p95 = por %p93, %p94
      %p97 = scmp.ne.s32.totalorder %s82, %s96
      %p98 = scmp.eq.s32.totalorder %s30, 0
      %p99 = por %p97, %p98
      %s101 = sadd.s32 %s100, 1
      %p104 = scmp.eq.s32.totalorder %s24, 1
      %p105 = scmp.ne.s32.totalorder %s100, %s102
      %p106 = scmp.eq.s32.totalorder %s24, 0
      %p107 = por %p105, %p106
      %p108 = scmp.ne.s32.totalorder %s100, %s102
      %p109 = scmp.eq.s32.totalorder %s29, 1
      %p110 = por %p108, %p109
      %p111 = scmp.ne.s32.totalorder %s102, %s103
      %p112 = scmp.eq.s32.totalorder %s29, 0
      %p113 = por %p111, %p112
      %p114 = scmp.ne.s32.totalorder %s102, %s103
      %p115 = scmp.eq.s32.totalorder %s30, 1
      %p116 = por %p114, %p115
      %p118 = scmp.ne.s32.totalorder %s103, %s117
      %p119 = scmp.eq.s32.totalorder %s30, 0
      %p120 = por %p118, %p119
      %s122 = sadd.s32 %s121, 1
      %p125 = scmp.eq.s32.totalorder %s24, 1
      %p126 = scmp.ne.s32.totalorder %s121, %s123
      %p127 = scmp.eq.s32.totalorder %s24, 0
      %p128 = por %p126, %p127
      %p129 = scmp.ne.s32.totalorder %s121, %s123
      %p130 = scmp.eq.s32.totalorder %s29, 1
      %p131 = por %p129, %p130
      %p132 = scmp.ne.s32.totalorder %s123, %s124
      %p133 = scmp.eq.s32.totalorder %s29, 0
      %p134 = por %p132, %p133
      %p135 = scmp.ne.s32.totalorder %s123, %s124
      %p136 = scmp.eq.s32.totalorder %s30, 1
      %p137 = por %p135, %p136
      %p139 = scmp.ne.s32.totalorder %s124, %s138
      %p140 = scmp.eq.s32.totalorder %s30, 0
      %p141 = por %p139, %p140
      %s142 = ssub.s32 %s24, %s31
      %p143 = scmp.eq.s32.totalorder %s142, 0
      %s145 = sadd.s32 %s144, 1
      %s146 = scalar_select %p143, %s144, %s145
      %p149 = pneg %p143
      %p150 = scmp.eq.s32.totalorder %s24, 1
      %p151 = por %p149, %p150
      %p152 = scmp.ne.s32.totalorder %s144, %s147
      %p153 = scmp.eq.s32.totalorder %s24, 0
      %p154 = por %p152, %p153
      %p155 = scmp.ne.s32.totalorder %s144, %s147
      %p156 = scmp.eq.s32.totalorder %s29, 1
      %p157 = por %p155, %p156
      %p158 = scmp.ne.s32.totalorder %s147, %s148
      %p159 = scmp.eq.s32.totalorder %s29, 0
      %p160 = por %p158, %p159
      %p161 = scmp.ne.s32.totalorder %s147, %s148
      %p162 = scmp.eq.s32.totalorder %s30, 1
      %p163 = por %p161, %p162
      %p165 = scmp.ne.s32.totalorder %s148, %s164
      %p166 = scmp.eq.s32.totalorder %s30, 0
      %p167 = por %p165, %p166
      %p168 = scmp.le.s32.totalorder 1, %s24
      %p169 = scmp.lt.s32.totalorder %s24, 3
      %p170 = pnand %p168, %p169
      %p171 = pneg %p170
      // Predicated region
      $region9: #{tpu_custom_call.1} parent=5 // pred_check
        _
      $region10: #{tpu_custom_call.1} parent=5 // pred_check_branch
        %173 = sbr.rel (%p170) target = $region12
      $region11: #{tpu_custom_call.1} parent=5 // pred_region
        %s174 = ssub.s32 %s24, 1
        // Predicated region
        $region13: #{tpu_custom_call.1} parent=11 // pred_check
          %p175 = pneg %p71
        $region14: #{tpu_custom_call.1} parent=11 // pred_check_branch
          %177 = sbr.rel (%p175) target = $region16
        $region15: #{tpu_custom_call.1} parent=11 // pred_region
          %s179 = ssub.s32 512, 512
          %180 = vsyncadd [#allocation8], %s179
          %s181 = sshll.u32 [#allocation7], 4
          %s182 = int_to_ptr.vmem [resolvable:$true] %s181
          %187 = dma.hbm_to_vmem [thread:$0]  %s2, 512, %s182, [#allocation8], 128, 128, 8
        $region16: #{tpu_custom_call.1} parent=11 // pred_fallthru
          _
        // Predicated region
        $region17: #{tpu_custom_call.1} parent=11 // pred_check
          %p188 = pneg %p92
        $region18: #{tpu_custom_call.1} parent=11 // pred_check_branch
          %190 = sbr.rel (%p188) target = $region20
        $region19: #{tpu_custom_call.1} parent=11 // pred_region
          %s192 = ssub.s32 512, 512
          %193 = vsyncadd [#allocation8], %s192
          %s194 = sshll.u32 [#allocation9], 4
          %s195 = int_to_ptr.vmem [resolvable:$true] %s194
          %200 = dma.hbm_to_vmem [thread:$0]  %s3, 512, %s195, [#allocation8], 128, 128, 8
        $region20: #{tpu_custom_call.1} parent=11 // pred_fallthru
          _
        // Predicated region
        $region21: #{tpu_custom_call.1} parent=11 // pred_check
          %p201 = pneg %p113
        $region22: #{tpu_custom_call.1} parent=11 // pred_check_branch
          %203 = sbr.rel (%p201) target = $region24
        $region23: #{tpu_custom_call.1} parent=11 // pred_region
          %s205 = ssub.s32 2560, 2560
          %206 = vsyncadd [#allocation11], %s205
          %s207 = sshll.u32 [#allocation10], 4
          %s208 = int_to_ptr.vmem [resolvable:$true] %s207
          %213 = dma.hbm_to_vmem [thread:$0]  %s4, 2560, %s208, [#allocation11], 128, 128, 8
        $region24: #{tpu_custom_call.1} parent=11 // pred_fallthru
          _
        // Predicated region
        $region25: #{tpu_custom_call.1} parent=11 // pred_check
          %p214 = pneg %p134
        $region26: #{tpu_custom_call.1} parent=11 // pred_check_branch
          %216 = sbr.rel (%p214) target = $region28
        $region27: #{tpu_custom_call.1} parent=11 // pred_region
          _
        $region28: #{tpu_custom_call.1} parent=11 // pred_fallthru
          _
      $region12: #{tpu_custom_call.1} parent=5 // pred_fallthru
        _
      %p217 = scmp.lt.s32.totalorder %s24, 2
      // Predicated region
      $region29: #{tpu_custom_call.1} parent=5 // pred_check
        %p218 = pneg %p217
      $region30: #{tpu_custom_call.1} parent=5 // pred_check_branch
        %220 = sbr.rel (%p218) target = $region32
      $region31: #{tpu_custom_call.1} parent=5 // pred_region
        // Predicated region
        $region33: #{tpu_custom_call.1} parent=31 // pred_check
          %p221 = pneg %p44
        $region34: #{tpu_custom_call.1} parent=31 // pred_check_branch
          %223 = sbr.rel (%p221) target = $region36
        $region35: #{tpu_custom_call.1} parent=31 // pred_region
          %s224 = sand.u32 %s34, 1
          %s225 = scalar_lea.sflag [#allocation5], %s224
          %s226 = sand.u32 %s34, 1
          %s227 = smul.addr %s226, 16
          %s228 = scalar_lea.vmem [#allocation4], %s227
          %s229 = smul.u32 2, %s24
          %s231 = ssub.s32 256, 256
          %232 = vsyncadd %s225, %s231
          %s233 = smul.addr %s229, 128
          %s234 = scalar_lea.hbm %s1, %s233
          %s235 = sshll.u32 %s228, 4
          %s236 = int_to_ptr.vmem [resolvable:$true] %s235
          %241 = dma.hbm_to_vmem [thread:$0]  %s234, 256, %s236, %s225, 128, 128, 8
        $region36: #{tpu_custom_call.1} parent=31 // pred_fallthru
          _
      $region32: #{tpu_custom_call.1} parent=5 // pred_fallthru
        _
      %p242 = scmp.le.s32.totalorder 1, %s24
      %p243 = scmp.lt.s32.totalorder %s24, 3
      %p244 = pnand %p242, %p243
      %p245 = pneg %p244
      // Predicated region
      $region37: #{tpu_custom_call.1} parent=5 // pred_check
        _
      $region38: #{tpu_custom_call.1} parent=5 // pred_check_branch
        %247 = sbr.rel (%p244) target = $region40
      $region39: #{tpu_custom_call.1} parent=5 // pred_region
        %s248 = ssub.s32 %s24, 1
        %s249 = sand.u32 %s37, 1
        %s250 = scalar_lea.sflag [#allocation5], %s249
        %s251 = sand.u32 %s37, 1
        %s252 = smul.addr %s251, 16
        %s253 = scalar_lea.vmem [#allocation4], %s252
        // Predicated region
        $region41: #{tpu_custom_call.1} parent=39 // pred_check
          %p254 = pneg %p50
        $region42: #{tpu_custom_call.1} parent=39 // pred_check_branch
          %256 = sbr.rel (%p254) target = $region44
        $region43: #{tpu_custom_call.1} parent=39 // pred_region
          %257 = dma.done %s250, 256
        $region44: #{tpu_custom_call.1} parent=39 // pred_fallthru
          _
        // Predicated region
        $region45: #{tpu_custom_call.1} parent=39 // pred_check
          %p258 = pneg %p71
        $region46: #{tpu_custom_call.1} parent=39 // pred_check_branch
          %260 = sbr.rel (%p258) target = $region48
        $region47: #{tpu_custom_call.1} parent=39 // pred_region
          %261 = dma.done [#allocation8], 512
        $region48: #{tpu_custom_call.1} parent=39 // pred_fallthru
          _
        // Predicated region
        $region49: #{tpu_custom_call.1} parent=39 // pred_check
          %p262 = pneg %p92
        $region50: #{tpu_custom_call.1} parent=39 // pred_check_branch
          %264 = sbr.rel (%p262) target = $region52
        $region51: #{tpu_custom_call.1} parent=39 // pred_region
          %265 = dma.done [#allocation8], 512
        $region52: #{tpu_custom_call.1} parent=39 // pred_fallthru
          _
        // Predicated region
        $region53: #{tpu_custom_call.1} parent=39 // pred_check
          %p266 = pneg %p113
        $region54: #{tpu_custom_call.1} parent=39 // pred_check_branch
          %268 = sbr.rel (%p266) target = $region56
        $region55: #{tpu_custom_call.1} parent=39 // pred_region
          %269 = dma.done [#allocation11], 2560
        $region56: #{tpu_custom_call.1} parent=39 // pred_fallthru
          _
        %s270 = sand.u32 %s37, 1
        %s271 = scalar_lea.sflag [#allocation5], %s270
        %s272 = sand.u32 %s37, 1
        %s273 = smul.addr %s272, 16
        %s274 = scalar_lea.vmem [#allocation4], %s273
        %p275 = pneg %p50
        %p276 = pneg %p47
        %p277 = pneg %p71
        %p278 = pneg %p68
        %p279 = pneg %p92
        %p280 = pneg %p89
        %p281 = pneg %p113
        %p282 = pneg %p110
        %p283 = pneg %p134
        %p284 = pneg %p131
        %p285 = pneg %p160
        %p286 = pneg %p157
        %s287 = sand.u32 %s147, 1
        %s288 = scalar_lea.sflag [#allocation6], %s287
        %s289 = sand.u32 %s147, 1
        %s290 = smul.addr %s289, 16
        %s291 = scalar_lea.vmem [#allocation12], %s290
        %s292 = smul.u32 2, %s29
        %s293 = smul.u32 2, %s29
        %v294 = vld [vmem:[%s253] sm:$0xff]
        %v295 = vld [vmem:[%s253 + $0x8] sm:$0xff]
        %v296 = vld [vmem:[%s5] sm:$0x1]
        %v297 = vld [vmem:[%s5 + $0x1] sm:$0x1]
        %v298 = vld [vmem:[%s5 + $0x2] sm:$0x1]
        %v299 = vld [vmem:[%s5 + $0x3] sm:$0x1]
        %v300 = vld [vmem:[%s5 + $0x4] sm:$0x1]
        %v301 = vld [vmem:[%s5 + $0x5] sm:$0x1]
        %v302 = vld [vmem:[%s5 + $0x6] sm:$0x1]
        %v303 = vld [vmem:[%s5 + $0x7] sm:$0x1]
        %vm304 = vcmask 261120
        %v305 = vsel %vm304, %v294, 0.0
        %306 = vadd.xlane.f32.xlu0 %v305
        %v307 = vpop.xlane.xlu0 %306
        %v308 = vsel %vm304, %v295, 0.0
        %309 = vadd.xlane.f32.xlu0 %v308
        %v310 = vpop.xlane.xlu0 %309
        %v311 = vrcp.pop 32.0
        %v312 = vmul.f32 %v307, %v311
        %v313 = vmul.f32 %v310, %v311
        %v314 = vsub.f32 %v294, %v312
        %v315 = vsub.f32 %v295, %v313
        %v316 = vmul.f32 %v314, %v314
        %v317 = vmul.f32 %v315, %v315
        %v318 = vsel %vm304, %v316, 0.0
        %319 = vadd.xlane.f32.xlu0 %v318
        %v320 = vpop.xlane.xlu0 %319
        %v321 = vsel %vm304, %v317, 0.0
        %322 = vadd.xlane.f32.xlu0 %v321
        %v323 = vpop.xlane.xlu0 %322
        %v324 = vmul.f32 %v320, %v311
        %v325 = vmul.f32 %v323, %v311
        %v326 = vadd.f32 %v324, 1e-05
        %v327 = vadd.f32 %v325, 1e-05
        %v328 = vrsqrt.pop %v326
        %v329 = vrsqrt.pop %v327
        %v330 = vmul.f32 %v314, %v328
        %v331 = vmul.f32 %v315, %v329
        %v332 = vlaneseq
        %v333 = vshrl.u32 %v332, 7
        %v334 = vsub.s32 0, %v333
        %v335 = vrot.slane %v296, %v334
        %v336 = vmul.f32 %v330, %v335
        %v337 = vmul.f32 %v331, %v335
        %v338 = vlaneseq
        %v339 = vshrl.u32 %v338, 7
        %v340 = vsub.s32 0, %v339
        %v341 = vrot.slane %v297, %v340
        %v342 = vadd.f32 %v336, %v341
        %v343 = vadd.f32 %v337, %v341
        %v344 = vld [vmem:[#allocation7] sm:$0xff]
        %v345 = vld [vmem:[#allocation7 + $0x8] sm:$0xff]
        %v346 = vld [vmem:[#allocation7 + $0x10] sm:$0xff]
        %v347 = vld [vmem:[#allocation7 + $0x18] sm:$0xff]
        %v348 = vlaneseq
        %v349 = vshrl.u32 %v348, 7
        %v350 = vsub.s32 0, %v349
        %v351 = vrot.slane %v303, %v350
        %v353 = vsel %vm304, %v342, 0
        %v356 = vsel %vm304, %v343, 0
        %358 = vmatprep.subr.mxu0 0.0
        %359 = vmatpush1.msra.mxu0 %v344
        %360 = vmatprep.subr.mxu0 0.0
        %361 = vmatpush1.msra.mxu0 %v345
        %362 = vmatprep.subr.mxu0 0.0
        %363 = vmatpush1.msra.mxu0 %v346
        %364 = vmatprep.subr.mxu0 0.0
        %365 = vmatpush1.msra.mxu0 %v347
        %366 = vmatprep.subr.mxu0 0.0
        %367 = vmatpush1.msra.mxu0 0.0
        %368 = vmatprep.subr.mxu0 0.0
        %369 = vmatpush1.msra.mxu0 0.0
        %370 = vmatprep.subr.mxu0 0.0
        %371 = vmatpush1.msra.mxu0 0.0
        %372 = vmatprep.subr.mxu0 0.0
        %373 = vmatpush1.msra.mxu0 0.0
        %374 = vmatprep.subr.mxu0 0.0
        %375 = vmatpush1.msra.mxu0 0.0
        %376 = vmatprep.subr.mxu0 0.0
        %377 = vmatpush1.msra.mxu0 0.0
        %378 = vmatprep.subr.mxu0 0.0
        %379 = vmatpush1.msra.mxu0 0.0
        %380 = vmatprep.subr.mxu0 0.0
        %381 = vmatpush1.msra.mxu0 0.0
        %382 = vmatprep.subr.mxu0 0.0
        %383 = vmatpush1.msra.mxu0 0.0
        %384 = vmatprep.subr.mxu0 0.0
        %385 = vmatpush1.msra.mxu0 0.0
        %386 = vmatprep.subr.mxu0 0.0
        %387 = vmatpush1.msra.mxu0 0.0
        %388 = vmatprep.subr.mxu0 0.0
        %389 = vmatpush1.msra.mxu0 0.0
        %390 = vmatprep.subr.mxu0 0.0
        %391 = vmatpush1.msra.mxu0 0.0
        %392 = vmatprep.subr.mxu0 0.0
        %393 = vmatpush1.msra.mxu0 0.0
        %394 = vmatprep.subr.mxu0 0.0
        %395 = vmatpush1.msra.mxu0 0.0
        %396 = vmatprep.subr.mxu0 0.0
        %397 = vmatpush1.msra.mxu0 0.0
        %398 = vmatprep.subr.mxu0 0.0
        %399 = vmatpush1.msra.mxu0 0.0
        %400 = vmatprep.subr.mxu0 0.0
        %401 = vmatpush1.msra.mxu0 0.0
        %402 = vmatprep.subr.mxu0 0.0
        %403 = vmatpush1.msra.mxu0 0.0
        %404 = vmatprep.subr.mxu0 0.0
        %405 = vmatpush1.msra.mxu0 0.0
        %406 = vmatprep.subr.mxu0 0.0
        %407 = vmatpush1.msra.mxu0 0.0
        %408 = vmatprep.subr.mxu0 0.0
        %409 = vmatpush1.msra.mxu0 0.0
        %410 = vmatprep.subr.mxu0 0.0
        %411 = vmatpush1.msra.mxu0 0.0
        %412 = vmatprep.subr.mxu0 0.0
        %413 = vmatpush1.msra.mxu0 0.0
        %414 = vmatprep.subr.mxu0 0.0
        %415 = vmatpush1.msra.mxu0 0.0
        %416 = vmatprep.subr.mxu0 0.0
        %417 = vmatpush1.msra.mxu0 0.0
        %418 = vmatprep.subr.mxu0 0.0
        %419 = vmatpush1.msra.mxu0 0.0
        %420 = vmatprep.subr.mxu0 0.0
        %421 = vmatpush1.msra.mxu0 0.0
        %422 = vmatprep.mubr.f32.mxu0 0.0
        %423 = vmatmul.mubr.f32.gmra.mrb[0].mxu0 %v353
        %v424 = vpop.f32.mrb[0].mxu0
        %v425 = vadd.f32 %v351, %v424
        %v426 = vpop.f32.mrb[0].mxu0
        %427 = vmatprep.mubr.f32.mxu0 0.0
        %428 = vmatmul.mubr.f32.gmra.mrb[0].mxu0 %v356
        %v429 = vpop.f32.mrb[0].mxu0
        %v430 = vadd.f32 %v351, %v429
        %v431 = vpop.f32.mrb[0].mxu0
        %432 = vdwg.mxu0
        %v433 = vlaneseq
        %v434 = vand.u32 %v433, 127
        %s435 = sld [smem:[#allocation3 + %s29]]
        %v436 = vstv %s435
        %vm437 = vcmp.lt.s32.totalorder %v434, %v436
        %440 = vrot.lane.b32.xlu0 %v425, 96
        %v441 = vpop.permute.xlu0 %440
        %442 = vrot.lane.b32.xlu0 %v430, 96
        %v443 = vpop.permute.xlu0 %442
        %vm444 = vcmask 64512
        %v445 = vsel %vm444, %v425, 0
        %v447 = vsel %vm444, %v430, 0
        %v449 = vsel %vm444, %v441, 0
        %v451 = vsel %vm444, %v443, 0
        %453 = vmatprep.subr.mxu0 0.0
        %454 = vmatpush1.xpose.msra.mxu0 %v449
        %455 = vmatprep.subr.mxu0 0.0
        %456 = vmatpush1.xpose.msra.mxu0 %v451
        %457 = vmatprep.subr.mxu0 0.0
        %458 = vmatpush1.xpose.msra.mxu0 0.0
        %459 = vmatprep.subr.mxu0 0.0
        %460 = vmatpush1.xpose.msra.mxu0 0.0
        %461 = vmatprep.subr.mxu0 0.0
        %462 = vmatpush1.xpose.msra.mxu0 0.0
        %463 = vmatprep.subr.mxu0 0.0
        %464 = vmatpush1.xpose.msra.mxu0 0.0
        %465 = vmatprep.subr.mxu0 0.0
        %466 = vmatpush1.xpose.msra.mxu0 0.0
        %467 = vmatprep.subr.mxu0 0.0
        %468 = vmatpush1.xpose.msra.mxu0 0.0
        %469 = vmatprep.subr.mxu0 0.0
        %470 = vmatpush1.xpose.msra.mxu0 0.0
        %471 = vmatprep.subr.mxu0 0.0
        %472 = vmatpush1.xpose.msra.mxu0 0.0
        %473 = vmatprep.subr.mxu0 0.0
        %474 = vmatpush1.xpose.msra.mxu0 0.0
        %475 = vmatprep.subr.mxu0 0.0
        %476 = vmatpush1.xpose.msra.mxu0 0.0
        %477 = vmatprep.subr.mxu0 0.0
        %478 = vmatpush1.xpose.msra.mxu0 0.0
        %479 = vmatprep.subr.mxu0 0.0
        %480 = vmatpush1.xpose.msra.mxu0 0.0
        %481 = vmatprep.subr.mxu0 0.0
        %482 = vmatpush1.xpose.msra.mxu0 0.0
        %483 = vmatprep.subr.mxu0 0.0
        %484 = vmatpush1.xpose.msra.mxu0 0.0
        %485 = vmatprep.subr.mxu0 0.0
        %486 = vmatpush1.xpose.msra.mxu0 0.0
        %487 = vmatprep.subr.mxu0 0.0
        %488 = vmatpush1.xpose.msra.mxu0 0.0
        %489 = vmatprep.subr.mxu0 0.0
        %490 = vmatpush1.xpose.msra.mxu0 0.0
        %491 = vmatprep.subr.mxu0 0.0
        %492 = vmatpush1.xpose.msra.mxu0 0.0
        %493 = vmatprep.subr.mxu0 0.0
        %494 = vmatpush1.xpose.msra.mxu0 0.0
        %495 = vmatprep.subr.mxu0 0.0
        %496 = vmatpush1.xpose.msra.mxu0 0.0
        %497 = vmatprep.subr.mxu0 0.0
        %498 = vmatpush1.xpose.msra.mxu0 0.0
        %499 = vmatprep.subr.mxu0 0.0
        %500 = vmatpush1.xpose.msra.mxu0 0.0
        %501 = vmatprep.subr.mxu0 0.0
        %502 = vmatpush1.xpose.msra.mxu0 0.0
        %503 = vmatprep.subr.mxu0 0.0
        %504 = vmatpush1.xpose.msra.mxu0 0.0
        %505 = vmatprep.subr.mxu0 0.0
        %506 = vmatpush1.xpose.msra.mxu0 0.0
        %507 = vmatprep.subr.mxu0 0.0
        %508 = vmatpush1.xpose.msra.mxu0 0.0
        %509 = vmatprep.subr.mxu0 0.0
        %510 = vmatpush1.xpose.msra.mxu0 0.0
        %511 = vmatprep.subr.mxu0 0.0
        %512 = vmatpush1.xpose.msra.mxu0 0.0
        %513 = vmatprep.subr.mxu0 0.0
        %514 = vmatpush1.xpose.msra.mxu0 0.0
        %515 = vmatprep.subr.mxu0 0.0
        %516 = vmatpush1.xpose.msra.mxu0 0.0
        %517 = vmatprep.mubr.f32.mxu0 0.0
        %518 = vmatmul.mubr.f32.gmra.mrb[0].mxu0 %v445
        %v519 = vpop.f32.mrb[0].mxu0
        %v520 = vadd.f32 0.0, %v519
        %v521 = vpop.f32.mrb[0].mxu0
        %522 = vmatprep.mubr.f32.mxu0 0.0
        %523 = vmatmul.mubr.f32.gmra.mrb[0].mxu0 %v447
        %v524 = vpop.f32.mrb[0].mxu0
        %v525 = vadd.f32 0.0, %v524
        %v526 = vpop.f32.mrb[0].mxu0
        %527 = vdwg.mxu0
        %v528 = vmul.f32 %v520, 0.35355338
        %v529 = vmul.f32 %v525, 0.35355338
        %v530 = vsel %vm437, 1, 0
        %vm531 = vcmp.eq.s32.totalorder %v530, 1
        %v532 = vsel %vm531, %v528, -1e+30
        %v533 = vsel %vm531, %v529, -1e+30
        %vm534 = vcmask 130048
        %v535 = vsel %vm534, %v532, -inf
        %536 = vmax.xlane.f32.xlu0 %v535
        %v537 = vpop.xlane.xlu0 %536
        %v538 = vsel %vm534, %v533, -inf
        %539 = vmax.xlane.f32.xlu0 %v538
        %v540 = vpop.xlane.xlu0 %539
        %v541 = vsub.f32 %v532, %v537
        %v542 = vsub.f32 %v533, %v540
        %v543 = vmul.f32 %v541, 1.442695
        %v544 = vpow.pop %v543
        %v545 = vmul.f32 %v542, 1.442695
        %v546 = vpow.pop %v545
        %v547 = vsel %vm534, %v544, 0.0
        %548 = vadd.xlane.f32.xlu0 %v547
        %v549 = vpop.xlane.xlu0 %548
        %v550 = vsel %vm534, %v546, 0.0
        %551 = vadd.xlane.f32.xlu0 %v550
        %v552 = vpop.xlane.xlu0 %551
        %v553 = vrcp.pop %v549
        %v554 = vrcp.pop %v552
        %v555 = vmul.f32 %v544, %v553
        %v556 = vmul.f32 %v546, %v554
        %557 = vrot.lane.b32.xlu0 %v425, 64
        %v558 = vpop.permute.xlu0 %557
        %559 = vrot.lane.b32.xlu0 %v430, 64
        %v560 = vpop.permute.xlu0 %559
        %v564 = vsel %vm534, %v555, 0
        %v567 = vsel %vm534, %v556, 0
        %569 = vmatprep.subr.mxu0 0.0
        %570 = vmatpush1.msra.mxu0 %v558
        %571 = vmatprep.subr.mxu0 0.0
        %572 = vmatpush1.msra.mxu0 %v560
        %573 = vmatprep.subr.mxu0 0.0
        %574 = vmatpush1.msra.mxu0 0.0
        %575 = vmatprep.subr.mxu0 0.0
        %576 = vmatpush1.msra.mxu0 0.0
        %577 = vmatprep.subr.mxu0 0.0
        %578 = vmatpush1.msra.mxu0 0.0
        %579 = vmatprep.subr.mxu0 0.0
        %580 = vmatpush1.msra.mxu0 0.0
        %581 = vmatprep.subr.mxu0 0.0
        %582 = vmatpush1.msra.mxu0 0.0
        %583 = vmatprep.subr.mxu0 0.0
        %584 = vmatpush1.msra.mxu0 0.0
        %585 = vmatprep.subr.mxu0 0.0
        %586 = vmatpush1.msra.mxu0 0.0
        %587 = vmatprep.subr.mxu0 0.0
        %588 = vmatpush1.msra.mxu0 0.0
        %589 = vmatprep.subr.mxu0 0.0
        %590 = vmatpush1.msra.mxu0 0.0
        %591 = vmatprep.subr.mxu0 0.0
        %592 = vmatpush1.msra.mxu0 0.0
        %593 = vmatprep.subr.mxu0 0.0
        %594 = vmatpush1.msra.mxu0 0.0
        %595 = vmatprep.subr.mxu0 0.0
        %596 = vmatpush1.msra.mxu0 0.0
        %597 = vmatprep.subr.mxu0 0.0
        %598 = vmatpush1.msra.mxu0 0.0
        %599 = vmatprep.subr.mxu0 0.0
        %600 = vmatpush1.msra.mxu0 0.0
        %601 = vmatprep.subr.mxu0 0.0
        %602 = vmatpush1.msra.mxu0 0.0
        %603 = vmatprep.subr.mxu0 0.0
        %604 = vmatpush1.msra.mxu0 0.0
        %605 = vmatprep.subr.mxu0 0.0
        %606 = vmatpush1.msra.mxu0 0.0
        %607 = vmatprep.subr.mxu0 0.0
        %608 = vmatpush1.msra.mxu0 0.0
        %609 = vmatprep.subr.mxu0 0.0
        %610 = vmatpush1.msra.mxu0 0.0
        %611 = vmatprep.subr.mxu0 0.0
        %612 = vmatpush1.msra.mxu0 0.0
        %613 = vmatprep.subr.mxu0 0.0
        %614 = vmatpush1.msra.mxu0 0.0
        %615 = vmatprep.subr.mxu0 0.0
        %616 = vmatpush1.msra.mxu0 0.0
        %617 = vmatprep.subr.mxu0 0.0
        %618 = vmatpush1.msra.mxu0 0.0
        %619 = vmatprep.subr.mxu0 0.0
        %620 = vmatpush1.msra.mxu0 0.0
        %621 = vmatprep.subr.mxu0 0.0
        %622 = vmatpush1.msra.mxu0 0.0
        %623 = vmatprep.subr.mxu0 0.0
        %624 = vmatpush1.msra.mxu0 0.0
        %625 = vmatprep.subr.mxu0 0.0
        %626 = vmatpush1.msra.mxu0 0.0
        %627 = vmatprep.subr.mxu0 0.0
        %628 = vmatpush1.msra.mxu0 0.0
        %629 = vmatprep.subr.mxu0 0.0
        %630 = vmatpush1.msra.mxu0 0.0
        %631 = vmatprep.subr.mxu0 0.0
        %632 = vmatpush1.msra.mxu0 0.0
        %633 = vmatprep.mubr.f32.mxu0 0.0
        %634 = vmatmul.mubr.f32.gmra.mrb[0].mxu0 %v564
        %v635 = vpop.f32.mrb[0].mxu0
        %v636 = vadd.f32 0.0, %v635
        %v637 = vpop.f32.mrb[0].mxu0
        %638 = vmatprep.mubr.f32.mxu0 0.0
        %639 = vmatmul.mubr.f32.gmra.mrb[0].mxu0 %v567
        %v640 = vpop.f32.mrb[0].mxu0
        %v641 = vadd.f32 0.0, %v640
        %v642 = vpop.f32.mrb[0].mxu0
        %643 = vdwg.mxu0
        %644 = vrot.lane.b32.xlu0 %v425, 120
        %v645 = vpop.permute.xlu0 %644
        %646 = vrot.lane.b32.xlu0 %v430, 120
        %v647 = vpop.permute.xlu0 %646
        %648 = vrot.lane.b32.xlu0 %v425, 88
        %v649 = vpop.permute.xlu0 %648
        %650 = vrot.lane.b32.xlu0 %v430, 88
        %v651 = vpop.permute.xlu0 %650
        %v652 = vsel %vm444, %v645, 0
        %v654 = vsel %vm444, %v647, 0
        %v656 = vsel %vm444, %v649, 0
        %v658 = vsel %vm444, %v651, 0
        %660 = vmatprep.subr.mxu0 0.0
        %661 = vmatpush1.xpose.msra.mxu0 %v656
        %662 = vmatprep.subr.mxu0 0.0
        %663 = vmatpush1.xpose.msra.mxu0 %v658
        %664 = vmatprep.subr.mxu0 0.0
        %665 = vmatpush1.xpose.msra.mxu0 0.0
        %666 = vmatprep.subr.mxu0 0.0
        %667 = vmatpush1.xpose.msra.mxu0 0.0
        %668 = vmatprep.subr.mxu0 0.0
        %669 = vmatpush1.xpose.msra.mxu0 0.0
        %670 = vmatprep.subr.mxu0 0.0
        %671 = vmatpush1.xpose.msra.mxu0 0.0
        %672 = vmatprep.subr.mxu0 0.0
        %673 = vmatpush1.xpose.msra.mxu0 0.0
        %674 = vmatprep.subr.mxu0 0.0
        %675 = vmatpush1.xpose.msra.mxu0 0.0
        %676 = vmatprep.subr.mxu0 0.0
        %677 = vmatpush1.xpose.msra.mxu0 0.0
        %678 = vmatprep.subr.mxu0 0.0
        %679 = vmatpush1.xpose.msra.mxu0 0.0
        %680 = vmatprep.subr.mxu0 0.0
        %681 = vmatpush1.xpose.msra.mxu0 0.0
        %682 = vmatprep.subr.mxu0 0.0
        %683 = vmatpush1.xpose.msra.mxu0 0.0
        %684 = vmatprep.subr.mxu0 0.0
        %685 = vmatpush1.xpose.msra.mxu0 0.0
        %686 = vmatprep.subr.mxu0 0.0
        %687 = vmatpush1.xpose.msra.mxu0 0.0
        %688 = vmatprep.subr.mxu0 0.0
        %689 = vmatpush1.xpose.msra.mxu0 0.0
        %690 = vmatprep.subr.mxu0 0.0
        %691 = vmatpush1.xpose.msra.mxu0 0.0
        %692 = vmatprep.subr.mxu0 0.0
        %693 = vmatpush1.xpose.msra.mxu0 0.0
        %694 = vmatprep.subr.mxu0 0.0
        %695 = vmatpush1.xpose.msra.mxu0 0.0
        %696 = vmatprep.subr.mxu0 0.0
        %697 = vmatpush1.xpose.msra.mxu0 0.0
        %698 = vmatprep.subr.mxu0 0.0
        %699 = vmatpush1.xpose.msra.mxu0 0.0
        %700 = vmatprep.subr.mxu0 0.0
        %701 = vmatpush1.xpose.msra.mxu0 0.0
        %702 = vmatprep.subr.mxu0 0.0
        %703 = vmatpush1.xpose.msra.mxu0 0.0
        %704 = vmatprep.subr.mxu0 0.0
        %705 = vmatpush1.xpose.msra.mxu0 0.0
        %706 = vmatprep.subr.mxu0 0.0
        %707 = vmatpush1.xpose.msra.mxu0 0.0
        %708 = vmatprep.subr.mxu0 0.0
        %709 = vmatpush1.xpose.msra.mxu0 0.0
        %710 = vmatprep.subr.mxu0 0.0
        %711 = vmatpush1.xpose.msra.mxu0 0.0
        %712 = vmatprep.subr.mxu0 0.0
        %713 = vmatpush1.xpose.msra.mxu0 0.0
        %714 = vmatprep.subr.mxu0 0.0
        %715 = vmatpush1.xpose.msra.mxu0 0.0
        %716 = vmatprep.subr.mxu0 0.0
        %717 = vmatpush1.xpose.msra.mxu0 0.0
        %718 = vmatprep.subr.mxu0 0.0
        %719 = vmatpush1.xpose.msra.mxu0 0.0
        %720 = vmatprep.subr.mxu0 0.0
        %721 = vmatpush1.xpose.msra.mxu0 0.0
        %722 = vmatprep.subr.mxu0 0.0
        %723 = vmatpush1.xpose.msra.mxu0 0.0
        %724 = vmatprep.mubr.f32.mxu0 0.0
        %725 = vmatmul.mubr.f32.gmra.mrb[0].mxu0 %v652
        %v726 = vpop.f32.mrb[0].mxu0
        %v727 = vadd.f32 0.0, %v726
        %v728 = vpop.f32.mrb[0].mxu0
        %729 = vmatprep.mubr.f32.mxu0 0.0
        %730 = vmatmul.mubr.f32.gmra.mrb[0].mxu0 %v654
        %v731 = vpop.f32.mrb[0].mxu0
        %v732 = vadd.f32 0.0, %v731
        %v733 = vpop.f32.mrb[0].mxu0
        %734 = vdwg.mxu0
        %v735 = vmul.f32 %v727, 0.35355338
        %v736 = vmul.f32 %v732, 0.35355338
        %v737 = vsel %vm531, %v735, -1e+30
        %v738 = vsel %vm531, %v736, -1e+30
        %v739 = vsel %vm534, %v737, -inf
        %740 = vmax.xlane.f32.xlu0 %v739
        %v741 = vpop.xlane.xlu0 %740
        %v742 = vsel %vm534, %v738, -inf
        %743 = vmax.xlane.f32.xlu0 %v742
        %v744 = vpop.xlane.xlu0 %743
        %v745 = vsub.f32 %v737, %v741
        %v746 = vsub.f32 %v738, %v744
        %v747 = vmul.f32 %v745, 1.442695
        %v748 = vpow.pop %v747
        %v749 = vmul.f32 %v746, 1.442695
        %v750 = vpow.pop %v749
        %v751 = vsel %vm534, %v748, 0.0
        %752 = vadd.xlane.f32.xlu0 %v751
        %v753 = vpop.xlane.xlu0 %752
        %v754 = vsel %vm534, %v750, 0.0
        %755 = vadd.xlane.f32.xlu0 %v754
        %v756 = vpop.xlane.xlu0 %755
        %v757 = vrcp.pop %v753
        %v758 = vrcp.pop %v756
        %v759 = vmul.f32 %v748, %v757
        %v760 = vmul.f32 %v750, %v758
        %761 = vrot.lane.b32.xlu0 %v425, 56
        %v762 = vpop.permute.xlu0 %761
        %763 = vrot.lane.b32.xlu0 %v430, 56
        %v764 = vpop.permute.xlu0 %763
        %v768 = vsel %vm534, %v759, 0
        %v771 = vsel %vm534, %v760, 0
        %773 = vmatprep.subr.mxu0 0.0
        %774 = vmatpush1.msra.mxu0 %v762
        %775 = vmatprep.subr.mxu0 0.0
        %776 = vmatpush1.msra.mxu0 %v764
        %777 = vmatprep.subr.mxu0 0.0
        %778 = vmatpush1.msra.mxu0 0.0
        %779 = vmatprep.subr.mxu0 0.0
        %780 = vmatpush1.msra.mxu0 0.0
        %781 = vmatprep.subr.mxu0 0.0
        %782 = vmatpush1.msra.mxu0 0.0
        %783 = vmatprep.subr.mxu0 0.0
        %784 = vmatpush1.msra.mxu0 0.0
        %785 = vmatprep.subr.mxu0 0.0
        %786 = vmatpush1.msra.mxu0 0.0
        %787 = vmatprep.subr.mxu0 0.0
        %788 = vmatpush1.msra.mxu0 0.0
        %789 = vmatprep.subr.mxu0 0.0
        %790 = vmatpush1.msra.mxu0 0.0
        %791 = vmatprep.subr.mxu0 0.0
        %792 = vmatpush1.msra.mxu0 0.0
        %793 = vmatprep.subr.mxu0 0.0
        %794 = vmatpush1.msra.mxu0 0.0
        %795 = vmatprep.subr.mxu0 0.0
        %796 = vmatpush1.msra.mxu0 0.0
        %797 = vmatprep.subr.mxu0 0.0
        %798 = vmatpush1.msra.mxu0 0.0
        %799 = vmatprep.subr.mxu0 0.0
        %800 = vmatpush1.msra.mxu0 0.0
        %801 = vmatprep.subr.mxu0 0.0
        %802 = vmatpush1.msra.mxu0 0.0
        %803 = vmatprep.subr.mxu0 0.0
        %804 = vmatpush1.msra.mxu0 0.0
        %805 = vmatprep.subr.mxu0 0.0
        %806 = vmatpush1.msra.mxu0 0.0
        %807 = vmatprep.subr.mxu0 0.0
        %808 = vmatpush1.msra.mxu0 0.0
        %809 = vmatprep.subr.mxu0 0.0
        %810 = vmatpush1.msra.mxu0 0.0
        %811 = vmatprep.subr.mxu0 0.0
        %812 = vmatpush1.msra.mxu0 0.0
        %813 = vmatprep.subr.mxu0 0.0
        %814 = vmatpush1.msra.mxu0 0.0
        %815 = vmatprep.subr.mxu0 0.0
        %816 = vmatpush1.msra.mxu0 0.0
        %817 = vmatprep.subr.mxu0 0.0
        %818 = vmatpush1.msra.mxu0 0.0
        %819 = vmatprep.subr.mxu0 0.0
        %820 = vmatpush1.msra.mxu0 0.0
        %821 = vmatprep.subr.mxu0 0.0
        %822 = vmatpush1.msra.mxu0 0.0
        %823 = vmatprep.subr.mxu0 0.0
        %824 = vmatpush1.msra.mxu0 0.0
        %825 = vmatprep.subr.mxu0 0.0
        %826 = vmatpush1.msra.mxu0 0.0
        %827 = vmatprep.subr.mxu0 0.0
        %828 = vmatpush1.msra.mxu0 0.0
        %829 = vmatprep.subr.mxu0 0.0
        %830 = vmatpush1.msra.mxu0 0.0
        %831 = vmatprep.subr.mxu0 0.0
        %832 = vmatpush1.msra.mxu0 0.0
        %833 = vmatprep.subr.mxu0 0.0
        %834 = vmatpush1.msra.mxu0 0.0
        %835 = vmatprep.subr.mxu0 0.0
        %836 = vmatpush1.msra.mxu0 0.0
        %837 = vmatprep.mubr.f32.mxu0 0.0
        %838 = vmatmul.mubr.f32.gmra.mrb[0].mxu0 %v768
        %v839 = vpop.f32.mrb[0].mxu0
        %v840 = vadd.f32 0.0, %v839
        %v841 = vpop.f32.mrb[0].mxu0
        %842 = vmatprep.mubr.f32.mxu0 0.0
        %843 = vmatmul.mubr.f32.gmra.mrb[0].mxu0 %v771
        %v844 = vpop.f32.mrb[0].mxu0
        %v845 = vadd.f32 0.0, %v844
        %v846 = vpop.f32.mrb[0].mxu0
        %847 = vdwg.mxu0
        %848 = vrot.lane.b32.xlu0 %v425, 112
        %v849 = vpop.permute.xlu0 %848
        %850 = vrot.lane.b32.xlu0 %v430, 112
        %v851 = vpop.permute.xlu0 %850
        %852 = vrot.lane.b32.xlu0 %v425, 80
        %v853 = vpop.permute.xlu0 %852
        %854 = vrot.lane.b32.xlu0 %v430, 80
        %v855 = vpop.permute.xlu0 %854
        %v856 = vsel %vm444, %v849, 0
        %v858 = vsel %vm444, %v851, 0
        %v860 = vsel %vm444, %v853, 0
        %v862 = vsel %vm444, %v855, 0
        %864 = vmatprep.subr.mxu0 0.0
        %865 = vmatpush1.xpose.msra.mxu0 %v860
        %866 = vmatprep.subr.mxu0 0.0
        %867 = vmatpush1.xpose.msra.mxu0 %v862
        %868 = vmatprep.subr.mxu0 0.0
        %869 = vmatpush1.xpose.msra.mxu0 0.0
        %870 = vmatprep.subr.mxu0 0.0
        %871 = vmatpush1.xpose.msra.mxu0 0.0
        %872 = vmatprep.subr.mxu0 0.0
        %873 = vmatpush1.xpose.msra.mxu0 0.0
        %874 = vmatprep.subr.mxu0 0.0
        %875 = vmatpush1.xpose.msra.mxu0 0.0
        %876 = vmatprep.subr.mxu0 0.0
        %877 = vmatpush1.xpose.msra.mxu0 0.0
        %878 = vmatprep.subr.mxu0 0.0
        %879 = vmatpush1.xpose.msra.mxu0 0.0
        %880 = vmatprep.subr.mxu0 0.0
        %881 = vmatpush1.xpose.msra.mxu0 0.0
        %882 = vmatprep.subr.mxu0 0.0
        %883 = vmatpush1.xpose.msra.mxu0 0.0
        %884 = vmatprep.subr.mxu0 0.0
        %885 = vmatpush1.xpose.msra.mxu0 0.0
        %886 = vmatprep.subr.mxu0 0.0
        %887 = vmatpush1.xpose.msra.mxu0 0.0
        %888 = vmatprep.subr.mxu0 0.0
        %889 = vmatpush1.xpose.msra.mxu0 0.0
        %890 = vmatprep.subr.mxu0 0.0
        %891 = vmatpush1.xpose.msra.mxu0 0.0
        %892 = vmatprep.subr.mxu0 0.0
        %893 = vmatpush1.xpose.msra.mxu0 0.0
        %894 = vmatprep.subr.mxu0 0.0
        %895 = vmatpush1.xpose.msra.mxu0 0.0
        %896 = vmatprep.subr.mxu0 0.0
        %897 = vmatpush1.xpose.msra.mxu0 0.0
        %898 = vmatprep.subr.mxu0 0.0
        %899 = vmatpush1.xpose.msra.mxu0 0.0
        %900 = vmatprep.subr.mxu0 0.0
        %901 = vmatpush1.xpose.msra.mxu0 0.0
        %902 = vmatprep.subr.mxu0 0.0
        %903 = vmatpush1.xpose.msra.mxu0 0.0
        %904 = vmatprep.subr.mxu0 0.0
        %905 = vmatpush1.xpose.msra.mxu0 0.0
        %906 = vmatprep.subr.mxu0 0.0
        %907 = vmatpush1.xpose.msra.mxu0 0.0
        %908 = vmatprep.subr.mxu0 0.0
        %909 = vmatpush1.xpose.msra.mxu0 0.0
        %910 = vmatprep.subr.mxu0 0.0
        %911 = vmatpush1.xpose.msra.mxu0 0.0
        %912 = vmatprep.subr.mxu0 0.0
        %913 = vmatpush1.xpose.msra.mxu0 0.0
        %914 = vmatprep.subr.mxu0 0.0
        %915 = vmatpush1.xpose.msra.mxu0 0.0
        %916 = vmatprep.subr.mxu0 0.0
        %917 = vmatpush1.xpose.msra.mxu0 0.0
        %918 = vmatprep.subr.mxu0 0.0
        %919 = vmatpush1.xpose.msra.mxu0 0.0
        %920 = vmatprep.subr.mxu0 0.0
        %921 = vmatpush1.xpose.msra.mxu0 0.0
        %922 = vmatprep.subr.mxu0 0.0
        %923 = vmatpush1.xpose.msra.mxu0 0.0
        %924 = vmatprep.subr.mxu0 0.0
        %925 = vmatpush1.xpose.msra.mxu0 0.0
        %926 = vmatprep.subr.mxu0 0.0
        %927 = vmatpush1.xpose.msra.mxu0 0.0
        %928 = vmatprep.mubr.f32.mxu0 0.0
        %929 = vmatmul.mubr.f32.gmra.mrb[0].mxu0 %v856
        %v930 = vpop.f32.mrb[0].mxu0
        %v931 = vadd.f32 0.0, %v930
        %v932 = vpop.f32.mrb[0].mxu0
        %933 = vmatprep.mubr.f32.mxu0 0.0
        %934 = vmatmul.mubr.f32.gmra.mrb[0].mxu0 %v858
        %v935 = vpop.f32.mrb[0].mxu0
        %v936 = vadd.f32 0.0, %v935
        %v937 = vpop.f32.mrb[0].mxu0
        %938 = vdwg.mxu0
        %v939 = vmul.f32 %v931, 0.35355338
        %v940 = vmul.f32 %v936, 0.35355338
        %v941 = vsel %vm531, %v939, -1e+30
        %v942 = vsel %vm531, %v940, -1e+30
        %v943 = vsel %vm534, %v941, -inf
        %944 = vmax.xlane.f32.xlu0 %v943
        %v945 = vpop.xlane.xlu0 %944
        %v946 = vsel %vm534, %v942, -inf
        %947 = vmax.xlane.f32.xlu0 %v946
        %v948 = vpop.xlane.xlu0 %947
        %v949 = vsub.f32 %v941, %v945
        %v950 = vsub.f32 %v942, %v948
        %v951 = vmul.f32 %v949, 1.442695
        %v952 = vpow.pop %v951
        %v953 = vmul.f32 %v950, 1.442695
        %v954 = vpow.pop %v953
        %v955 = vsel %vm534, %v952, 0.0
        %956 = vadd.xlane.f32.xlu0 %v955
        %v957 = vpop.xlane.xlu0 %956
        %v958 = vsel %vm534, %v954, 0.0
        %959 = vadd.xlane.f32.xlu0 %v958
        %v960 = vpop.xlane.xlu0 %959
        %v961 = vrcp.pop %v957
        %v962 = vrcp.pop %v960
        %v963 = vmul.f32 %v952, %v961
        %v964 = vmul.f32 %v954, %v962
        %965 = vrot.lane.b32.xlu0 %v425, 48
        %v966 = vpop.permute.xlu0 %965
        %967 = vrot.lane.b32.xlu0 %v430, 48
        %v968 = vpop.permute.xlu0 %967
        %v972 = vsel %vm534, %v963, 0
        %v975 = vsel %vm534, %v964, 0
        %977 = vmatprep.subr.mxu0 0.0
        %978 = vmatpush1.msra.mxu0 %v966
        %979 = vmatprep.subr.mxu0 0.0
        %980 = vmatpush1.msra.mxu0 %v968
        %981 = vmatprep.subr.mxu0 0.0
        %982 = vmatpush1.msra.mxu0 0.0
        %983 = vmatprep.subr.mxu0 0.0
        %984 = vmatpush1.msra.mxu0 0.0
        %985 = vmatprep.subr.mxu0 0.0
        %986 = vmatpush1.msra.mxu0 0.0
        %987 = vmatprep.subr.mxu0 0.0
        %988 = vmatpush1.msra.mxu0 0.0
        %989 = vmatprep.subr.mxu0 0.0
        %990 = vmatpush1.msra.mxu0 0.0
        %991 = vmatprep.subr.mxu0 0.0
        %992 = vmatpush1.msra.mxu0 0.0
        %993 = vmatprep.subr.mxu0 0.0
        %994 = vmatpush1.msra.mxu0 0.0
        %995 = vmatprep.subr.mxu0 0.0
        %996 = vmatpush1.msra.mxu0 0.0
        %997 = vmatprep.subr.mxu0 0.0
        %998 = vmatpush1.msra.mxu0 0.0
        %999 = vmatprep.subr.mxu0 0.0
        %1000 = vmatpush1.msra.mxu0 0.0
        %1001 = vmatprep.subr.mxu0 0.0
        %1002 = vmatpush1.msra.mxu0 0.0
        %1003 = vmatprep.subr.mxu0 0.0
        %1004 = vmatpush1.msra.mxu0 0.0
        %1005 = vmatprep.subr.mxu0 0.0
        %1006 = vmatpush1.msra.mxu0 0.0
        %1007 = vmatprep.subr.mxu0 0.0
        %1008 = vmatpush1.msra.mxu0 0.0
        %1009 = vmatprep.subr.mxu0 0.0
        %1010 = vmatpush1.msra.mxu0 0.0
        %1011 = vmatprep.subr.mxu0 0.0
        %1012 = vmatpush1.msra.mxu0 0.0
        %1013 = vmatprep.subr.mxu0 0.0
        %1014 = vmatpush1.msra.mxu0 0.0
        %1015 = vmatprep.subr.mxu0 0.0
        %1016 = vmatpush1.msra.mxu0 0.0
        %1017 = vmatprep.subr.mxu0 0.0
        %1018 = vmatpush1.msra.mxu0 0.0
        %1019 = vmatprep.subr.mxu0 0.0
        %1020 = vmatpush1.msra.mxu0 0.0
        %1021 = vmatprep.subr.mxu0 0.0
        %1022 = vmatpush1.msra.mxu0 0.0
        %1023 = vmatprep.subr.mxu0 0.0
        %1024 = vmatpush1.msra.mxu0 0.0
        %1025 = vmatprep.subr.mxu0 0.0
        %1026 = vmatpush1.msra.mxu0 0.0
        %1027 = vmatprep.subr.mxu0 0.0
        %1028 = vmatpush1.msra.mxu0 0.0
        %1029 = vmatprep.subr.mxu0 0.0
        %1030 = vmatpush1.msra.mxu0 0.0
        %1031 = vmatprep.subr.mxu0 0.0
        %1032 = vmatpush1.msra.mxu0 0.0
        %1033 = vmatprep.subr.mxu0 0.0
        %1034 = vmatpush1.msra.mxu0 0.0
        %1035 = vmatprep.subr.mxu0 0.0
        %1036 = vmatpush1.msra.mxu0 0.0
        %1037 = vmatprep.subr.mxu0 0.0
        %1038 = vmatpush1.msra.mxu0 0.0
        %1039 = vmatprep.subr.mxu0 0.0
        %1040 = vmatpush1.msra.mxu0 0.0
        %1041 = vmatprep.mubr.f32.mxu0 0.0
        %1042 = vmatmul.mubr.f32.gmra.mrb[0].mxu0 %v972
        %v1043 = vpop.f32.mrb[0].mxu0
        %v1044 = vadd.f32 0.0, %v1043
        %v1045 = vpop.f32.mrb[0].mxu0
        %1046 = vmatprep.mubr.f32.mxu0 0.0
        %1047 = vmatmul.mubr.f32.gmra.mrb[0].mxu0 %v975
        %v1048 = vpop.f32.mrb[0].mxu0
        %v1049 = vadd.f32 0.0, %v1048
        %v1050 = vpop.f32.mrb[0].mxu0
        %1051 = vdwg.mxu0
        %1052 = vrot.lane.b32.xlu0 %v425, 104
        %v1053 = vpop.permute.xlu0 %1052
        %1054 = vrot.lane.b32.xlu0 %v430, 104
        %v1055 = vpop.permute.xlu0 %1054
        %1056 = vrot.lane.b32.xlu0 %v425, 72
        %v1057 = vpop.permute.xlu0 %1056
        %1058 = vrot.lane.b32.xlu0 %v430, 72
        %v1059 = vpop.permute.xlu0 %1058
        %v1060 = vsel %vm444, %v1053, 0
        %v1062 = vsel %vm444, %v1055, 0
        %v1064 = vsel %vm444, %v1057, 0
        %v1066 = vsel %vm444, %v1059, 0
        %1068 = vmatprep.subr.mxu0 0.0
        %1069 = vmatpush1.xpose.msra.mxu0 %v1064
        %1070 = vmatprep.subr.mxu0 0.0
        %1071 = vmatpush1.xpose.msra.mxu0 %v1066
        %1072 = vmatprep.subr.mxu0 0.0
        %1073 = vmatpush1.xpose.msra.mxu0 0.0
        %1074 = vmatprep.subr.mxu0 0.0
        %1075 = vmatpush1.xpose.msra.mxu0 0.0
        %1076 = vmatprep.subr.mxu0 0.0
        %1077 = vmatpush1.xpose.msra.mxu0 0.0
        %1078 = vmatprep.subr.mxu0 0.0
        %1079 = vmatpush1.xpose.msra.mxu0 0.0
        %1080 = vmatprep.subr.mxu0 0.0
        %1081 = vmatpush1.xpose.msra.mxu0 0.0
        %1082 = vmatprep.subr.mxu0 0.0
        %1083 = vmatpush1.xpose.msra.mxu0 0.0
        %1084 = vmatprep.subr.mxu0 0.0
        %1085 = vmatpush1.xpose.msra.mxu0 0.0
        %1086 = vmatprep.subr.mxu0 0.0
        %1087 = vmatpush1.xpose.msra.mxu0 0.0
        %1088 = vmatprep.subr.mxu0 0.0
        %1089 = vmatpush1.xpose.msra.mxu0 0.0
        %1090 = vmatprep.subr.mxu0 0.0
        %1091 = vmatpush1.xpose.msra.mxu0 0.0
        %1092 = vmatprep.subr.mxu0 0.0
        %1093 = vmatpush1.xpose.msra.mxu0 0.0
        %1094 = vmatprep.subr.mxu0 0.0
        %1095 = vmatpush1.xpose.msra.mxu0 0.0
        %1096 = vmatprep.subr.mxu0 0.0
        %1097 = vmatpush1.xpose.msra.mxu0 0.0
        %1098 = vmatprep.subr.mxu0 0.0
        %1099 = vmatpush1.xpose.msra.mxu0 0.0
        %1100 = vmatprep.subr.mxu0 0.0
        %1101 = vmatpush1.xpose.msra.mxu0 0.0
        %1102 = vmatprep.subr.mxu0 0.0
        %1103 = vmatpush1.xpose.msra.mxu0 0.0
        %1104 = vmatprep.subr.mxu0 0.0
        %1105 = vmatpush1.xpose.msra.mxu0 0.0
        %1106 = vmatprep.subr.mxu0 0.0
        %1107 = vmatpush1.xpose.msra.mxu0 0.0
        %1108 = vmatprep.subr.mxu0 0.0
        %1109 = vmatpush1.xpose.msra.mxu0 0.0
        %1110 = vmatprep.subr.mxu0 0.0
        %1111 = vmatpush1.xpose.msra.mxu0 0.0
        %1112 = vmatprep.subr.mxu0 0.0
        %1113 = vmatpush1.xpose.msra.mxu0 0.0
        %1114 = vmatprep.subr.mxu0 0.0
        %1115 = vmatpush1.xpose.msra.mxu0 0.0
        %1116 = vmatprep.subr.mxu0 0.0
        %1117 = vmatpush1.xpose.msra.mxu0 0.0
        %1118 = vmatprep.subr.mxu0 0.0
        %1119 = vmatpush1.xpose.msra.mxu0 0.0
        %1120 = vmatprep.subr.mxu0 0.0
        %1121 = vmatpush1.xpose.msra.mxu0 0.0
        %1122 = vmatprep.subr.mxu0 0.0
        %1123 = vmatpush1.xpose.msra.mxu0 0.0
        %1124 = vmatprep.subr.mxu0 0.0
        %1125 = vmatpush1.xpose.msra.mxu0 0.0
        %1126 = vmatprep.subr.mxu0 0.0
        %1127 = vmatpush1.xpose.msra.mxu0 0.0
        %1128 = vmatprep.subr.mxu0 0.0
        %1129 = vmatpush1.xpose.msra.mxu0 0.0
        %1130 = vmatprep.subr.mxu0 0.0
        %1131 = vmatpush1.xpose.msra.mxu0 0.0
        %1132 = vmatprep.mubr.f32.mxu0 0.0
        %1133 = vmatmul.mubr.f32.gmra.mrb[0].mxu0 %v1060
        %v1134 = vpop.f32.mrb[0].mxu0
        %v1135 = vadd.f32 0.0, %v1134
        %v1136 = vpop.f32.mrb[0].mxu0
        %1137 = vmatprep.mubr.f32.mxu0 0.0
        %1138 = vmatmul.mubr.f32.gmra.mrb[0].mxu0 %v1062
        %v1139 = vpop.f32.mrb[0].mxu0
        %v1140 = vadd.f32 0.0, %v1139
        %v1141 = vpop.f32.mrb[0].mxu0
        %1142 = vdwg.mxu0
        %v1143 = vmul.f32 %v1135, 0.35355338
        %v1144 = vmul.f32 %v1140, 0.35355338
        %v1145 = vsel %vm531, %v1143, -1e+30
        %v1146 = vsel %vm531, %v1144, -1e+30
        %v1147 = vsel %vm534, %v1145, -inf
        %1148 = vmax.xlane.f32.xlu0 %v1147
        %v1149 = vpop.xlane.xlu0 %1148
        %v1150 = vsel %vm534, %v1146, -inf
        %1151 = vmax.xlane.f32.xlu0 %v1150
        %v1152 = vpop.xlane.xlu0 %1151
        %v1153 = vsub.f32 %v1145, %v1149
        %v1154 = vsub.f32 %v1146, %v1152
        %v1155 = vmul.f32 %v1153, 1.442695
        %v1156 = vpow.pop %v1155
        %v1157 = vmul.f32 %v1154, 1.442695
        %v1158 = vpow.pop %v1157
        %v1159 = vsel %vm534, %v1156, 0.0
        %1160 = vadd.xlane.f32.xlu0 %v1159
        %v1161 = vpop.xlane.xlu0 %1160
        %v1162 = vsel %vm534, %v1158, 0.0
        %1163 = vadd.xlane.f32.xlu0 %v1162
        %v1164 = vpop.xlane.xlu0 %1163
        %v1165 = vrcp.pop %v1161
        %v1166 = vrcp.pop %v1164
        %v1167 = vmul.f32 %v1156, %v1165
        %v1168 = vmul.f32 %v1158, %v1166
        %1169 = vrot.lane.b32.xlu0 %v425, 40
        %v1170 = vpop.permute.xlu0 %1169
        %1171 = vrot.lane.b32.xlu0 %v430, 40
        %v1172 = vpop.permute.xlu0 %1171
        %v1176 = vsel %vm534, %v1167, 0
        %v1179 = vsel %vm534, %v1168, 0
        %1181 = vmatprep.subr.mxu0 0.0
        %1182 = vmatpush1.msra.mxu0 %v1170
        %1183 = vmatprep.subr.mxu0 0.0
        %1184 = vmatpush1.msra.mxu0 %v1172
        %1185 = vmatprep.subr.mxu0 0.0
        %1186 = vmatpush1.msra.mxu0 0.0
        %1187 = vmatprep.subr.mxu0 0.0
        %1188 = vmatpush1.msra.mxu0 0.0
        %1189 = vmatprep.subr.mxu0 0.0
        %1190 = vmatpush1.msra.mxu0 0.0
        %1191 = vmatprep.subr.mxu0 0.0
        %1192 = vmatpush1.msra.mxu0 0.0
        %1193 = vmatprep.subr.mxu0 0.0
        %1194 = vmatpush1.msra.mxu0 0.0
        %1195 = vmatprep.subr.mxu0 0.0
        %1196 = vmatpush1.msra.mxu0 0.0
        %1197 = vmatprep.subr.mxu0 0.0
        %1198 = vmatpush1.msra.mxu0 0.0
        %1199 = vmatprep.subr.mxu0 0.0
        %1200 = vmatpush1.msra.mxu0 0.0
        %1201 = vmatprep.subr.mxu0 0.0
        %1202 = vmatpush1.msra.mxu0 0.0
        %1203 = vmatprep.subr.mxu0 0.0
        %1204 = vmatpush1.msra.mxu0 0.0
        %1205 = vmatprep.subr.mxu0 0.0
        %1206 = vmatpush1.msra.mxu0 0.0
        %1207 = vmatprep.subr.mxu0 0.0
        %1208 = vmatpush1.msra.mxu0 0.0
        %1209 = vmatprep.subr.mxu0 0.0
        %1210 = vmatpush1.msra.mxu0 0.0
        %1211 = vmatprep.subr.mxu0 0.0
        %1212 = vmatpush1.msra.mxu0 0.0
        %1213 = vmatprep.subr.mxu0 0.0
        %1214 = vmatpush1.msra.mxu0 0.0
        %1215 = vmatprep.subr.mxu0 0.0
        %1216 = vmatpush1.msra.mxu0 0.0
        %1217 = vmatprep.subr.mxu0 0.0
        %1218 = vmatpush1.msra.mxu0 0.0
        %1219 = vmatprep.subr.mxu0 0.0
        %1220 = vmatpush1.msra.mxu0 0.0
        %1221 = vmatprep.subr.mxu0 0.0
        %1222 = vmatpush1.msra.mxu0 0.0
        %1223 = vmatprep.subr.mxu0 0.0
        %1224 = vmatpush1.msra.mxu0 0.0
        %1225 = vmatprep.subr.mxu0 0.0
        %1226 = vmatpush1.msra.mxu0 0.0
        %1227 = vmatprep.subr.mxu0 0.0
        %1228 = vmatpush1.msra.mxu0 0.0
        %1229 = vmatprep.subr.mxu0 0.0
        %1230 = vmatpush1.msra.mxu0 0.0
        %1231 = vmatprep.subr.mxu0 0.0
        %1232 = vmatpush1.msra.mxu0 0.0
        %1233 = vmatprep.subr.mxu0 0.0
        %1234 = vmatpush1.msra.mxu0 0.0
        %1235 = vmatprep.subr.mxu0 0.0
        %1236 = vmatpush1.msra.mxu0 0.0
        %1237 = vmatprep.subr.mxu0 0.0
        %1238 = vmatpush1.msra.mxu0 0.0
        %1239 = vmatprep.subr.mxu0 0.0
        %1240 = vmatpush1.msra.mxu0 0.0
        %1241 = vmatprep.subr.mxu0 0.0
        %1242 = vmatpush1.msra.mxu0 0.0
        %1243 = vmatprep.subr.mxu0 0.0
        %1244 = vmatpush1.msra.mxu0 0.0
        %1245 = vmatprep.mubr.f32.mxu0 0.0
        %1246 = vmatmul.mubr.f32.gmra.mrb[0].mxu0 %v1176
        %v1247 = vpop.f32.mrb[0].mxu0
        %v1248 = vadd.f32 0.0, %v1247
        %v1249 = vpop.f32.mrb[0].mxu0
        %1250 = vmatprep.mubr.f32.mxu0 0.0
        %1251 = vmatmul.mubr.f32.gmra.mrb[0].mxu0 %v1179
        %v1252 = vpop.f32.mrb[0].mxu0
        %v1253 = vadd.f32 0.0, %v1252
        %v1254 = vpop.f32.mrb[0].mxu0
        %1255 = vdwg.mxu0
        %1258 = vrot.lane.b32.xlu0 %v840, 8
        %v1259 = vpop.permute.xlu0 %1258
        %1260 = vrot.lane.b32.xlu0 %v845, 8
        %v1261 = vpop.permute.xlu0 %1260
        %1266 = vrot.lane.b32.xlu0 %v1044, 16
        %v1267 = vpop.permute.xlu0 %1266
        %1268 = vrot.lane.b32.xlu0 %v1049, 16
        %v1269 = vpop.permute.xlu0 %1268
        %1274 = vrot.lane.b32.xlu0 %v1248, 24
        %v1275 = vpop.permute.xlu0 %1274
        %1276 = vrot.lane.b32.xlu0 %v1253, 24
        %v1277 = vpop.permute.xlu0 %1276
        %v1280 = vsel %vm444, %v636, %v1259
        %v1281 = vsel %vm444, %v641, %v1261
        %v1282 = vsel %vm534, %v1280, %v1267
        %v1283 = vsel %vm534, %v1281, %v1269
        %vm1284 = vcmask 195584
        %v1285 = vsel %vm1284, %v1282, %v1275
        %v1286 = vsel %vm1284, %v1283, %v1277
        %v1287 = vld [vmem:[#allocation9] sm:$0xff]
        %v1288 = vld [vmem:[#allocation9 + $0x8] sm:$0xff]
        %v1289 = vld [vmem:[#allocation9 + $0x10] sm:$0xff]
        %v1290 = vld [vmem:[#allocation9 + $0x18] sm:$0xff]
        %v1291 = vlaneseq
        %v1292 = vshrl.u32 %v1291, 7
        %v1293 = vsub.s32 0, %v1292
        %v1294 = vrot.slane %v300, %v1293
        %v1296 = vsel %vm304, %v1285, 0
        %v1299 = vsel %vm304, %v1286, 0
        %1301 = vmatprep.subr.mxu0 0.0
        %1302 = vmatpush1.msra.mxu0 %v1287
        %1303 = vmatprep.subr.mxu0 0.0
        %1304 = vmatpush1.msra.mxu0 %v1288
        %1305 = vmatprep.subr.mxu0 0.0
        %1306 = vmatpush1.msra.mxu0 %v1289
        %1307 = vmatprep.subr.mxu0 0.0
        %1308 = vmatpush1.msra.mxu0 %v1290
        %1309 = vmatprep.subr.mxu0 0.0
        %1310 = vmatpush1.msra.mxu0 0.0
        %1311 = vmatprep.subr.mxu0 0.0
        %1312 = vmatpush1.msra.mxu0 0.0
        %1313 = vmatprep.subr.mxu0 0.0
        %1314 = vmatpush1.msra.mxu0 0.0
        %1315 = vmatprep.subr.mxu0 0.0
        %1316 = vmatpush1.msra.mxu0 0.0
        %1317 = vmatprep.subr.mxu0 0.0
        %1318 = vmatpush1.msra.mxu0 0.0
        %1319 = vmatprep.subr.mxu0 0.0
        %1320 = vmatpush1.msra.mxu0 0.0
        %1321 = vmatprep.subr.mxu0 0.0
        %1322 = vmatpush1.msra.mxu0 0.0
        %1323 = vmatprep.subr.mxu0 0.0
        %1324 = vmatpush1.msra.mxu0 0.0
        %1325 = vmatprep.subr.mxu0 0.0
        %1326 = vmatpush1.msra.mxu0 0.0
        %1327 = vmatprep.subr.mxu0 0.0
        %1328 = vmatpush1.msra.mxu0 0.0
        %1329 = vmatprep.subr.mxu0 0.0
        %1330 = vmatpush1.msra.mxu0 0.0
        %1331 = vmatprep.subr.mxu0 0.0
        %1332 = vmatpush1.msra.mxu0 0.0
        %1333 = vmatprep.subr.mxu0 0.0
        %1334 = vmatpush1.msra.mxu0 0.0
        %1335 = vmatprep.subr.mxu0 0.0
        %1336 = vmatpush1.msra.mxu0 0.0
        %1337 = vmatprep.subr.mxu0 0.0
        %1338 = vmatpush1.msra.mxu0 0.0
        %1339 = vmatprep.subr.mxu0 0.0
        %1340 = vmatpush1.msra.mxu0 0.0
        %1341 = vmatprep.subr.mxu0 0.0
        %1342 = vmatpush1.msra.mxu0 0.0
        %1343 = vmatprep.subr.mxu0 0.0
        %1344 = vmatpush1.msra.mxu0 0.0
        %1345 = vmatprep.subr.mxu0 0.0
        %1346 = vmatpush1.msra.mxu0 0.0
        %1347 = vmatprep.subr.mxu0 0.0
        %1348 = vmatpush1.msra.mxu0 0.0
        %1349 = vmatprep.subr.mxu0 0.0
        %1350 = vmatpush1.msra.mxu0 0.0
        %1351 = vmatprep.subr.mxu0 0.0
        %1352 = vmatpush1.msra.mxu0 0.0
        %1353 = vmatprep.subr.mxu0 0.0
        %1354 = vmatpush1.msra.mxu0 0.0
        %1355 = vmatprep.subr.mxu0 0.0
        %1356 = vmatpush1.msra.mxu0 0.0
        %1357 = vmatprep.subr.mxu0 0.0
        %1358 = vmatpush1.msra.mxu0 0.0
        %1359 = vmatprep.subr.mxu0 0.0
        %1360 = vmatpush1.msra.mxu0 0.0
        %1361 = vmatprep.subr.mxu0 0.0
        %1362 = vmatpush1.msra.mxu0 0.0
        %1363 = vmatprep.subr.mxu0 0.0
        %1364 = vmatpush1.msra.mxu0 0.0
        %1365 = vmatprep.mubr.f32.mxu0 0.0
        %1366 = vmatmul.mubr.f32.gmra.mrb[0].mxu0 %v1296
        %v1367 = vpop.f32.mrb[0].mxu0
        %v1368 = vadd.f32 %v1294, %v1367
        %v1369 = vpop.f32.mrb[0].mxu0
        %1370 = vmatprep.mubr.f32.mxu0 0.0
        %1371 = vmatmul.mubr.f32.gmra.mrb[0].mxu0 %v1299
        %v1372 = vpop.f32.mrb[0].mxu0
        %v1373 = vadd.f32 %v1294, %v1372
        %v1374 = vpop.f32.mrb[0].mxu0
        %1375 = vdwg.mxu0
        %v1376 = vadd.f32 %v294, %v1368
        %v1377 = vadd.f32 %v295, %v1373
        %v1378 = vsel %vm304, %v1376, 0.0
        %1379 = vadd.xlane.f32.xlu0 %v1378
        %v1380 = vpop.xlane.xlu0 %1379
        %v1381 = vsel %vm304, %v1377, 0.0
        %1382 = vadd.xlane.f32.xlu0 %v1381
        %v1383 = vpop.xlane.xlu0 %1382
        %v1384 = vmul.f32 %v1380, %v311
        %v1385 = vmul.f32 %v1383, %v311
        %v1386 = vsub.f32 %v1376, %v1384
        %v1387 = vsub.f32 %v1377, %v1385
        %v1388 = vmul.f32 %v1386, %v1386
        %v1389 = vmul.f32 %v1387, %v1387
        %v1390 = vsel %vm304, %v1388, 0.0
        %1391 = vadd.xlane.f32.xlu0 %v1390
        %v1392 = vpop.xlane.xlu0 %1391
        %v1393 = vsel %vm304, %v1389, 0.0
        %1394 = vadd.xlane.f32.xlu0 %v1393
        %v1395 = vpop.xlane.xlu0 %1394
        %v1396 = vmul.f32 %v1392, %v311
        %v1397 = vmul.f32 %v1395, %v311
        %v1398 = vadd.f32 %v1396, 1e-05
        %v1399 = vadd.f32 %v1397, 1e-05
        %v1400 = vrsqrt.pop %v1398
        %v1401 = vrsqrt.pop %v1399
        %v1402 = vmul.f32 %v1386, %v1400
        %v1403 = vmul.f32 %v1387, %v1401
        %v1404 = vlaneseq
        %v1405 = vshrl.u32 %v1404, 7
        %v1406 = vsub.s32 0, %v1405
        %v1407 = vrot.slane %v298, %v1406
        %v1408 = vmul.f32 %v1402, %v1407
        %v1409 = vmul.f32 %v1403, %v1407
        %v1410 = vlaneseq
        %v1411 = vshrl.u32 %v1410, 7
        %v1412 = vsub.s32 0, %v1411
        %v1413 = vrot.slane %v299, %v1412
        %v1414 = vadd.f32 %v1408, %v1413
        %v1415 = vadd.f32 %v1409, %v1413
        %v1416 = vld [vmem:[#allocation10] sm:$0xff]
        %v1417 = vld [vmem:[#allocation10 + $0x8] sm:$0xff]
        %v1418 = vld [vmem:[#allocation10 + $0x10] sm:$0xff]
        %v1419 = vld [vmem:[#allocation10 + $0x18] sm:$0xff]
        %v1420 = vld [vmem:[#allocation10 + $0x20] sm:$0xff]
        %v1421 = vld [vmem:[#allocation10 + $0x28] sm:$0xff]
        %v1422 = vld [vmem:[#allocation10 + $0x30] sm:$0xff]
        %v1423 = vld [vmem:[#allocation10 + $0x38] sm:$0xff]
        %v1424 = vld [vmem:[#allocation10 + $0x40] sm:$0xff]
        %v1425 = vld [vmem:[#allocation10 + $0x48] sm:$0xff]
        %v1426 = vld [vmem:[#allocation10 + $0x50] sm:$0xff]
        %v1427 = vld [vmem:[#allocation10 + $0x58] sm:$0xff]
        %v1428 = vld [vmem:[#allocation10 + $0x60] sm:$0xff]
        %v1429 = vld [vmem:[#allocation10 + $0x68] sm:$0xff]
        %v1430 = vld [vmem:[#allocation10 + $0x70] sm:$0xff]
        %v1431 = vld [vmem:[#allocation10 + $0x78] sm:$0xff]
        %v1432 = vld [vmem:[#allocation10 + $0x80] sm:$0xff]
        %v1433 = vld [vmem:[#allocation10 + $0x88] sm:$0xff]
        %v1434 = vld [vmem:[#allocation10 + $0x90] sm:$0xff]
        %v1435 = vld [vmem:[#allocation10 + $0x98] sm:$0xff]
        %v1436 = vlaneseq
        %v1437 = vshrl.u32 %v1436, 7
        %v1438 = vsub.s32 0, %v1437
        %v1439 = vrot.slane %v302, %v1438
        %v1441 = vsel %vm304, %v1414, 0
        %v1444 = vsel %vm304, %v1415, 0
        %1446 = vmatprep.subr.mxu0 0.0
        %1447 = vmatpush1.msra.mxu0 %v1416
        %1448 = vmatprep.subr.mxu0 0.0
        %1449 = vmatpush1.msra.mxu0 %v1417
        %1450 = vmatprep.subr.mxu0 0.0
        %1451 = vmatpush1.msra.mxu0 %v1418
        %1452 = vmatprep.subr.mxu0 0.0
        %1453 = vmatpush1.msra.mxu0 %v1419
        %1454 = vmatprep.subr.mxu0 0.0
        %1455 = vmatpush1.msra.mxu0 0.0
        %1456 = vmatprep.subr.mxu0 0.0
        %1457 = vmatpush1.msra.mxu0 0.0
        %1458 = vmatprep.subr.mxu0 0.0
        %1459 = vmatpush1.msra.mxu0 0.0
        %1460 = vmatprep.subr.mxu0 0.0
        %1461 = vmatpush1.msra.mxu0 0.0
        %1462 = vmatprep.subr.mxu0 0.0
        %1463 = vmatpush1.msra.mxu0 0.0
        %1464 = vmatprep.subr.mxu0 0.0
        %1465 = vmatpush1.msra.mxu0 0.0
        %1466 = vmatprep.subr.mxu0 0.0
        %1467 = vmatpush1.msra.mxu0 0.0
        %1468 = vmatprep.subr.mxu0 0.0
        %1469 = vmatpush1.msra.mxu0 0.0
        %1470 = vmatprep.subr.mxu0 0.0
        %1471 = vmatpush1.msra.mxu0 0.0
        %1472 = vmatprep.subr.mxu0 0.0
        %1473 = vmatpush1.msra.mxu0 0.0
        %1474 = vmatprep.subr.mxu0 0.0
        %1475 = vmatpush1.msra.mxu0 0.0
        %1476 = vmatprep.subr.mxu0 0.0
        %1477 = vmatpush1.msra.mxu0 0.0
        %1478 = vmatprep.subr.mxu0 0.0
        %1479 = vmatpush1.msra.mxu0 0.0
        %1480 = vmatprep.subr.mxu0 0.0
        %1481 = vmatpush1.msra.mxu0 0.0
        %1482 = vmatprep.subr.mxu0 0.0
        %1483 = vmatpush1.msra.mxu0 0.0
        %1484 = vmatprep.subr.mxu0 0.0
        %1485 = vmatpush1.msra.mxu0 0.0
        %1486 = vmatprep.subr.mxu0 0.0
        %1487 = vmatpush1.msra.mxu0 0.0
        %1488 = vmatprep.subr.mxu0 0.0
        %1489 = vmatpush1.msra.mxu0 0.0
        %1490 = vmatprep.subr.mxu0 0.0
        %1491 = vmatpush1.msra.mxu0 0.0
        %1492 = vmatprep.subr.mxu0 0.0
        %1493 = vmatpush1.msra.mxu0 0.0
        %1494 = vmatprep.subr.mxu0 0.0
        %1495 = vmatpush1.msra.mxu0 0.0
        %1496 = vmatprep.subr.mxu0 0.0
        %1497 = vmatpush1.msra.mxu0 0.0
        %1498 = vmatprep.subr.mxu0 0.0
        %1499 = vmatpush1.msra.mxu0 0.0
        %1500 = vmatprep.subr.mxu0 0.0
        %1501 = vmatpush1.msra.mxu0 0.0
        %1502 = vmatprep.subr.mxu0 0.0
        %1503 = vmatpush1.msra.mxu0 0.0
        %1504 = vmatprep.subr.mxu0 0.0
        %1505 = vmatpush1.msra.mxu0 0.0
        %1506 = vmatprep.subr.mxu0 0.0
        %1507 = vmatpush1.msra.mxu0 0.0
        %1508 = vmatprep.subr.mxu0 0.0
        %1509 = vmatpush1.msra.mxu0 0.0
        %1510 = vmatprep.mubr.f32.mxu0 0.0
        %1511 = vmatmul.mubr.f32.gmra.mrb[0].mxu0 %v1441
        %v1512 = vpop.f32.mrb[0].mxu0
        %v1513 = vadd.f32 %v1439, %v1512
        %v1514 = vpop.f32.mrb[0].mxu0
        %1515 = vmatprep.mubr.f32.mxu0 0.0
        %1516 = vmatmul.mubr.f32.gmra.mrb[0].mxu0 %v1444
        %v1517 = vpop.f32.mrb[0].mxu0
        %v1518 = vadd.f32 %v1439, %v1517
        %v1519 = vpop.f32.mrb[0].mxu0
        %1520 = vdwg.mxu0
        %v1521 = vmul.f32 %v1513, 0.5
        %v1522 = vmul.f32 %v1518, 0.5
        %v1523 = vmul.f32 %v1513, 0.044715
        %v1524 = vmul.f32 %v1518, 0.044715
        %v1525 = vmul.f32 %v1523, %v1513
        %v1526 = vmul.f32 %v1524, %v1518
        %v1527 = vmul.f32 %v1525, %v1513
        %v1528 = vmul.f32 %v1526, %v1518
        %v1529 = vadd.f32 %v1513, %v1527
        %v1530 = vadd.f32 %v1518, %v1528
        %v1531 = vmul.f32 %v1529, 0.7978846
        %v1532 = vmul.f32 %v1530, 0.7978846
        %v1533 = vtanh.pop %v1531
        %v1534 = vtanh.pop %v1532
        %v1535 = vadd.f32 %v1533, 1.0
        %v1536 = vadd.f32 %v1534, 1.0
        %v1537 = vmul.f32 %v1521, %v1535
        %v1538 = vmul.f32 %v1522, %v1536
        %v1539 = vlaneseq
        %v1540 = vshrl.u32 %v1539, 7
        %v1541 = vsub.s32 0, %v1540
        %v1542 = vrot.slane %v301, %v1541
        %1543 = vmatprep.subr.mxu0 0.0
        %1544 = vmatpush1.msra.mxu0 %v1420
        %1545 = vmatprep.subr.mxu0 0.0
        %1546 = vmatpush1.msra.mxu0 %v1421
        %1547 = vmatprep.subr.mxu0 0.0
        %1548 = vmatpush1.msra.mxu0 %v1422
        %1549 = vmatprep.subr.mxu0 0.0
        %1550 = vmatpush1.msra.mxu0 %v1423
        %1551 = vmatprep.subr.mxu0 0.0
        %1552 = vmatpush1.msra.mxu0 %v1424
        %1553 = vmatprep.subr.mxu0 0.0
        %1554 = vmatpush1.msra.mxu0 %v1425
        %1555 = vmatprep.subr.mxu0 0.0
        %1556 = vmatpush1.msra.mxu0 %v1426
        %1557 = vmatprep.subr.mxu0 0.0
        %1558 = vmatpush1.msra.mxu0 %v1427
        %1559 = vmatprep.subr.mxu0 0.0
        %1560 = vmatpush1.msra.mxu0 %v1428
        %1561 = vmatprep.subr.mxu0 0.0
        %1562 = vmatpush1.msra.mxu0 %v1429
        %1563 = vmatprep.subr.mxu0 0.0
        %1564 = vmatpush1.msra.mxu0 %v1430
        %1565 = vmatprep.subr.mxu0 0.0
        %1566 = vmatpush1.msra.mxu0 %v1431
        %1567 = vmatprep.subr.mxu0 0.0
        %1568 = vmatpush1.msra.mxu0 %v1432
        %1569 = vmatprep.subr.mxu0 0.0
        %1570 = vmatpush1.msra.mxu0 %v1433
        %1571 = vmatprep.subr.mxu0 0.0
        %1572 = vmatpush1.msra.mxu0 %v1434
        %1573 = vmatprep.subr.mxu0 0.0
        %1574 = vmatpush1.msra.mxu0 %v1435
        %1575 = vmatprep.subr.mxu0 0.0
        %1576 = vmatpush1.msra.mxu0 0.0
        %1577 = vmatprep.subr.mxu0 0.0
        %1578 = vmatpush1.msra.mxu0 0.0
        %1579 = vmatprep.subr.mxu0 0.0
        %1580 = vmatpush1.msra.mxu0 0.0
        %1581 = vmatprep.subr.mxu0 0.0
        %1582 = vmatpush1.msra.mxu0 0.0
        %1583 = vmatprep.subr.mxu0 0.0
        %1584 = vmatpush1.msra.mxu0 0.0
        %1585 = vmatprep.subr.mxu0 0.0
        %1586 = vmatpush1.msra.mxu0 0.0
        %1587 = vmatprep.subr.mxu0 0.0
        %1588 = vmatpush1.msra.mxu0 0.0
        %1589 = vmatprep.subr.mxu0 0.0
        %1590 = vmatpush1.msra.mxu0 0.0
        %1591 = vmatprep.subr.mxu0 0.0
        %1592 = vmatpush1.msra.mxu0 0.0
        %1593 = vmatprep.subr.mxu0 0.0
        %1594 = vmatpush1.msra.mxu0 0.0
        %1595 = vmatprep.subr.mxu0 0.0
        %1596 = vmatpush1.msra.mxu0 0.0
        %1597 = vmatprep.subr.mxu0 0.0
        %1598 = vmatpush1.msra.mxu0 0.0
        %1599 = vmatprep.subr.mxu0 0.0
        %1600 = vmatpush1.msra.mxu0 0.0
        %1601 = vmatprep.subr.mxu0 0.0
        %1602 = vmatpush1.msra.mxu0 0.0
        %1603 = vmatprep.subr.mxu0 0.0
        %1604 = vmatpush1.msra.mxu0 0.0
        %1605 = vmatprep.subr.mxu0 0.0
        %1606 = vmatpush1.msra.mxu0 0.0
        %1607 = vmatprep.mubr.f32.mxu0 0.0
        %1608 = vmatmul.mubr.f32.gmra.mrb[0].mxu0 %v1537
        %v1609 = vpop.f32.mrb[0].mxu0
        %v1610 = vadd.f32 %v1542, %v1609
        %v1611 = vpop.f32.mrb[0].mxu0
        %1612 = vmatprep.mubr.f32.mxu0 0.0
        %1613 = vmatmul.mubr.f32.gmra.mrb[0].mxu0 %v1538
        %v1614 = vpop.f32.mrb[0].mxu0
        %v1615 = vadd.f32 %v1542, %v1614
        %v1616 = vpop.f32.mrb[0].mxu0
        %1617 = vdwg.mxu0
        %v1618 = vadd.f32 %v1376, %v1610
        %v1619 = vadd.f32 %v1377, %v1615
        %1620 = vst.msk [vmem:[%s291] sm:$0xff] %vm304, %v1618
        %1621 = vst.msk [vmem:[%s291 + $0x8] sm:$0xff] %vm304, %v1619
        %s1622 = sand.u32 %s147, 1
        %s1623 = scalar_lea.sflag [#allocation6], %s1622
        %s1624 = sand.u32 %s147, 1
        %s1625 = smul.addr %s1624, 16
        %s1626 = scalar_lea.vmem [#allocation12], %s1625
        // Predicated region
        $region57: #{tpu_custom_call.1} parent=39 // pred_check
          %p1627 = pneg %p157
        $region58: #{tpu_custom_call.1} parent=39 // pred_check_branch
          %1629 = sbr.rel (%p1627) target = $region60
        $region59: #{tpu_custom_call.1} parent=39 // pred_region
          %s1630 = smul.u32 2, %s29
          %s1632 = ssub.s32 256, 256
          %1633 = vsyncadd %s1623, %s1632
          %s1634 = smul.addr %s1630, 128
          %s1635 = scalar_lea.hbm %s6, %s1634
          %s1636 = sshll.u32 %s1626, 4
          %s1637 = int_to_ptr.vmem [resolvable:$true] %s1636
          %1642 = dma.vmem_to_hbm [thread:$0]  %s1637, 256, %s1635, %s1623, 128, 128, 8
        $region60: #{tpu_custom_call.1} parent=39 // pred_fallthru
          _
      $region40: #{tpu_custom_call.1} parent=5 // pred_fallthru
        _
      %p1643 = scmp.le.s32.totalorder 2, %s24
      // Predicated region
      $region61: #{tpu_custom_call.1} parent=5 // pred_check
        %p1644 = pneg %p1643
      $region62: #{tpu_custom_call.1} parent=5 // pred_check_branch
        %1646 = sbr.rel (%p1644) target = $region64
      $region63: #{tpu_custom_call.1} parent=5 // pred_region
        %s1647 = ssub.s32 %s24, 2
        // Predicated region
        $region65: #{tpu_custom_call.1} parent=63 // pred_check
          %p1648 = pneg %p163
        $region66: #{tpu_custom_call.1} parent=63 // pred_check_branch
          %1650 = sbr.rel (%p1648) target = $region68
        $region67: #{tpu_custom_call.1} parent=63 // pred_region
          %s1651 = sand.u32 %s148, 1
          %s1652 = scalar_lea.sflag [#allocation6], %s1651
          %s1653 = sand.u32 %s148, 1
          %s1654 = smul.addr %s1653, 16
          %s1655 = scalar_lea.vmem [#allocation12], %s1654
          %1656 = dma.done %s1652, 256
        $region68: #{tpu_custom_call.1} parent=63 // pred_fallthru
          _
      $region64: #{tpu_custom_call.1} parent=5 // pred_fallthru
        _
    $region6: #{tpu_custom_call.1} parent=1 // loop_footer
      %s28 = sadd.s32 1, %s24
    $region7: #{tpu_custom_call.1} parent=1 // loop_footer_branch
      %23 = sbr.rel target = $region3
    $region8: #{tpu_custom_call.1} parent=1 // loop_exit
      _
    %1657 = vsyncpa [#allocation5], 1
    %s1658 = scalar_lea.sflag [#allocation5], 1
    %1659 = vsyncpa %s1658, 1
    %1660 = vsyncpa [#allocation8], 1
    %1661 = vsyncpa [#allocation11], 1
    %1662 = vsyncpa [#allocation6], 1
    %s1663 = scalar_lea.sflag [#allocation6], 1
    %1664 = vsyncpa %s1663, 1

</llo_original>
